<compile_context>
chip_gen: v6e
topology: v6e:2x2x1
jax: 0.10.0
libtpu: 0.0.40
codegen_flags: <defaults>
</compile_context>

<pallas_src>
import functools
import math

import jax
import jax.numpy as jnp
from jax import lax
from jax.experimental import pallas as pl
from jax.experimental.pallas import tpu as pltpu


def _flash_mha_kernel(q_ref, k_ref, v_ref, wp_ref, bp_ref, o_ref,
                      *, blk_q: int, n_head: int, head_size: int):
    """Causal flash attention + output projection for one (batch, query block).

    q_ref:  (H, blk_q, hs)  bf16, pre-scaled by 1/sqrt(hs)
    k_ref:  (H, T, hs)      bf16 (resident across query blocks)
    v_ref:  (H, T, hs)      bf16 (resident across query blocks)
    wp_ref: (C, C)          bf16, already transposed (in, out)
    bp_ref: (1, C)          f32 projection bias
    o_ref:  (blk_q, C)      output block
    """
    qi = pl.program_id(1)

    q = q_ref[...]                                            # (H, bq, hs) bf16

    m0 = jnp.full((n_head, blk_q, 1), -jnp.inf, dtype=jnp.float32)
    l0 = jnp.zeros((n_head, blk_q, 1), dtype=jnp.float32)
    a0 = jnp.zeros((n_head, blk_q, head_size), dtype=jnp.float32)

    def attend(kv_start, carry, mask):
        m, l, acc = carry
        k_t = k_ref[:, pl.ds(kv_start, blk_q), :]             # (H, bq, hs) bf16
        v_t = v_ref[:, pl.ds(kv_start, blk_q), :]             # (H, bq, hs) bf16
        s = jnp.einsum('hqd,hkd->hqk', q, k_t,
                       preferred_element_type=jnp.float32)    # (H, bq, bq) f32
        if mask is not None:
            s = jnp.where(mask, s, -jnp.inf)
        m_new = jnp.maximum(m, jnp.max(s, axis=-1, keepdims=True))
        alpha = jnp.exp(m - m_new)
        p = jnp.exp(s - m_new)
        l_new = alpha * l + jnp.sum(p, axis=-1, keepdims=True)
        acc_new = alpha * acc + jnp.einsum('hqk,hkd->hqd',
                                           p.astype(v_t.dtype), v_t,
                                           preferred_element_type=jnp.float32)
        return m_new, l_new, acc_new

    # Phase 1: fully-unmasked KV blocks strictly below the diagonal (no iota,
    # no compare/select).  Upper-triangular blocks are never visited.
    def unmasked_step(kv, carry):
        return attend(pl.multiple_of(kv * blk_q, blk_q), carry, None)

    carry = lax.fori_loop(0, qi, unmasked_step, (m0, l0, a0))

    # Phase 2: single masked diagonal block (local lower-triangular mask).
    row = lax.broadcasted_iota(jnp.int32, (1, blk_q, blk_q), 1)
    col = lax.broadcasted_iota(jnp.int32, (1, blk_q, blk_q), 2)
    _, l, acc = attend(pl.multiple_of(qi * blk_q, blk_q), carry, col <= row)

    # Finalize: softmax normalization (EUP approx reciprocal), merge heads into
    # the (blk_q, C) context layout, one deep-K output projection, add bias.
    out = (acc * pl.reciprocal(l, approx=True)).astype(wp_ref.dtype)  # (H, bq, hs)
    ctx = jnp.concatenate([out[h] for h in range(n_head)], axis=-1)   # (bq, C) bf16
    proj = jnp.dot(ctx, wp_ref[...], preferred_element_type=jnp.float32)
    o_ref[...] = (proj + bp_ref[...]).astype(o_ref.dtype)


def multi_head_attention(x, wq, wk, wv, wp, bp, *, n_head: int, blk_q=None,
                         compute_dtype=jnp.bfloat16, vmem_limit_mb=48):
    """x: (B, T, C); wq/wk/wv/wp: PyTorch-style (out, in) = (C, C); bp: (C,)."""
    B, T, C = x.shape
    assert C % n_head == 0, "C must be divisible by n_head"
    hs = C // n_head
    if blk_q is None:
        blk_q = min(T, 256)
    assert T % blk_q == 0, "T must be divisible by the query block size"
    nq = T // blk_q
    scale = 1.0 / math.sqrt(hs)

    # QKV projections as single large XLA matmuls (no in-kernel recompute);
    # fold the attention scale into Q; cast MXU operands to bf16.
    def split_heads(y):
        return y.reshape(B, T, n_head, hs).transpose(0, 2, 1, 3)

    q = split_heads((x @ wq.T) * scale).astype(compute_dtype)        # (B,H,T,hs)
    k = split_heads(x @ wk.T).astype(compute_dtype)                  # (B,H,T,hs)
    v = split_heads(x @ wv.T).astype(compute_dtype)                  # (B,H,T,hs)
    wpT = wp.T.astype(compute_dtype)                                 # (C, C)
    bp2 = bp.reshape(1, C).astype(jnp.float32)                       # (1, C)

    kernel = functools.partial(_flash_mha_kernel, blk_q=blk_q,
                               n_head=n_head, head_size=hs)

    itemsize = jnp.dtype(compute_dtype).itemsize
    cost = pl.CostEstimate(
        flops=int(4 * B * n_head * T * T * hs + 2 * B * T * C * C),
        transcendentals=int(B * n_head * T * T),
        bytes_accessed=int(3 * B * n_head * T * hs * itemsize
                           + C * C * itemsize
                           + B * T * C * jnp.dtype(x.dtype).itemsize),
    )

    return pl.pallas_call(
        kernel,
        out_shape=jax.ShapeDtypeStruct((B, T, C), x.dtype),
        grid_spec=pltpu.PrefetchScalarGridSpec(
            num_scalar_prefetch=0,
            grid=(B, nq),
            in_specs=[
                # Q: one (H, blk_q, hs) tile per step.
                pl.BlockSpec((None, n_head, blk_q, hs),
                             lambda b, qi: (b, 0, qi, 0)),
                # K/V: full sequence for this batch element; index map is
                # constant in qi -> stays VMEM-resident across query blocks.
                pl.BlockSpec((None, n_head, T, hs),
                             lambda b, qi: (b, 0, 0, 0)),
                pl.BlockSpec((None, n_head, T, hs),
                             lambda b, qi: (b, 0, 0, 0)),
                # Output projection weight and bias: fetched once.
                pl.BlockSpec((C, C), lambda b, qi: (0, 0)),
                pl.BlockSpec((1, C), lambda b, qi: (0, 0)),
            ],
            out_specs=pl.BlockSpec((None, blk_q, C), lambda b, qi: (b, qi, 0)),
        ),
        compiler_params=pltpu.CompilerParams(
            # Megacore shards the batch axis; qi kept sequential so the causal
            # work ramp does not imbalance the two v7x TensorCores.
            dimension_semantics=("parallel", "arbitrary"),
            vmem_limit_bytes=vmem_limit_mb * 1024 * 1024),
        cost_estimate=cost,
    )(q, k, v, wpT, bp2)


def _reference(x, wq, wk, wv, wp, bp, n_head):
    B, T, C = x.shape
    hs = C // n_head
    q = (x @ wq.T).reshape(B, T, n_head, hs).transpose(0, 2, 1, 3)
    k = (x @ wk.T).reshape(B, T, n_head, hs).transpose(0, 2, 1, 3)
    v = (x @ wv.T).reshape(B, T, n_head, hs).transpose(0, 2, 1, 3)
    att = jnp.einsum("bhqd,bhkd->bhqk", q, k) / (hs ** 0.5)
    mask = jnp.tril(jnp.ones((T, T), bool))
    att = jnp.where(mask, att, -jnp.inf)
    att = jax.nn.softmax(att, axis=-1)
    out = jnp.einsum("bhqk,bhkd->bhqd", att, v)
    out = out.transpose(0, 2, 1, 3).reshape(B, T, C)
    return out @ wp.T + bp


if __name__ == "__main__":
    # Shapes implied by the module: B=2, T=block_size=8, C=n_embd=32, n_head=4
    B, T, C, n_head = 2, 8, 32, 4

    key = jax.random.PRNGKey(0)
    kx, kq, kk, kv, kp, kb = jax.random.split(key, 6)

    x = jax.random.normal(kx, (B, T, C), dtype=jnp.float32)
    wq = jax.random.normal(kq, (C, C), dtype=jnp.float32) * 0.1
    wk = jax.random.normal(kk, (C, C), dtype=jnp.float32) * 0.1
    wv = jax.random.normal(kv, (C, C), dtype=jnp.float32) * 0.1
    wp = jax.random.normal(kp, (C, C), dtype=jnp.float32) * 0.1
    bp = jax.random.normal(kb, (C,), dtype=jnp.float32) * 0.1

    out = multi_head_attention(x, wq, wk, wv, wp, bp, n_head=n_head)
    out = jax.block_until_ready(out)

    ref = _reference(x, wq, wk, wv, wp, bp, n_head)
    assert out.shape == (B, T, C)
    # Tolerance accounts for bf16 MXU operands (f32 accumulation) and the
    # hardware approximate reciprocal in the softmax normalization.
    assert jnp.allclose(out, ref, atol=2e-2, rtol=2e-2), "mismatch vs reference"

    print("KERNEL_OK")
</pallas_src>

<mosaic_0001>
module attributes {stable_mosaic.version = 11 : i64} {
  func.func @_flash_mha_kernel(%arg0: i32, %arg1: i32, %arg2: memref<1x4x8x8xbf16, #tpu.memory_space<vmem>>, %arg3: memref<1x4x8x8xbf16, #tpu.memory_space<vmem>>, %arg4: memref<1x4x8x8xbf16, #tpu.memory_space<vmem>>, %arg5: memref<32x32xbf16, #tpu.memory_space<vmem>>, %arg6: memref<1x32xf32, #tpu.memory_space<vmem>>, %arg7: memref<1x8x32xf32, #tpu.memory_space<vmem>>) attributes {dimension_semantics = [#tpu.dimension_semantics<parallel>, #tpu.dimension_semantics<arbitrary>], iteration_bounds = array<i64: 2, 1>, scalar_prefetch = 0 : i64, scratch_operands = 0 : i64, tpu.core_type = #tpu.core_type<tc>, window_params = [{transform_indices = @transform_0, window_bounds = array<i64: 1, 4, 8, 8>}, {transform_indices = @transform_1, window_bounds = array<i64: 1, 4, 8, 8>}, {transform_indices = @transform_2, window_bounds = array<i64: 1, 4, 8, 8>}, {pipeline_mode = #tpu.pipeline_mode<synchronous>, transform_indices = @transform_3, window_bounds = array<i64: 32, 32>}, {pipeline_mode = #tpu.pipeline_mode<synchronous>, transform_indices = @transform_4, window_bounds = array<i64: 1, 32>}, {transform_indices = @transform_5, window_bounds = array<i64: 1, 8, 32>}]} {
    %c0 = arith.constant 0 : index
    %c0_0 = arith.constant 0 : index
    %c0_1 = arith.constant 0 : index
    %c0_2 = arith.constant 0 : index
    %0 = vector.load %arg2[%c0, %c0_0, %c0_1, %c0_2] : memref<1x4x8x8xbf16, #tpu.memory_space<vmem>>, vector<1x4x8x8xbf16>
    %1 = vector.shape_cast %0 : vector<1x4x8x8xbf16> to vector<4x8x8xbf16>
    %cst = arith.constant 0xFF800000 : f32
    %2 = vector.broadcast %cst : f32 to vector<4x8x1xf32>
    %cst_3 = arith.constant 0.000000e+00 : f32
    %3 = vector.broadcast %cst_3 : f32 to vector<4x8x1xf32>
    %cst_4 = arith.constant 0.000000e+00 : f32
    %4 = vector.broadcast %cst_4 : f32 to vector<4x8x8xf32>
    %c0_i32 = arith.constant 0 : i32
    %5 = arith.subi %arg1, %c0_i32 : i32
    %6 = arith.addi %c0_i32, %5 : i32
    %c1_i32 = arith.constant 1 : i32
    %7:3 = scf.for %arg8 = %c0_i32 to %6 step %c1_i32 iter_args(%arg9 = %2, %arg10 = %3, %arg11 = %4) -> (vector<4x8x1xf32>, vector<4x8x1xf32>, vector<4x8x8xf32>)  : i32 {
      %c8_i32_24 = arith.constant 8 : i32
      %62 = arith.muli %arg8, %c8_i32_24 : i32
      %63 = tpu.assume_multiple %62, 8 : i32
      %c0_25 = arith.constant 0 : index
      %c0_26 = arith.constant 0 : index
      %64 = arith.index_cast %63 : i32 to index
      %c0_27 = arith.constant 0 : index
      %65 = vector.load %arg3[%c0_25, %c0_26, %64, %c0_27] : memref<1x4x8x8xbf16, #tpu.memory_space<vmem>>, vector<1x4x8x8xbf16>
      %66 = vector.shape_cast %65 : vector<1x4x8x8xbf16> to vector<4x8x8xbf16>
      %c0_28 = arith.constant 0 : index
      %c0_29 = arith.constant 0 : index
      %67 = arith.index_cast %63 : i32 to index
      %c0_30 = arith.constant 0 : index
      %68 = vector.load %arg4[%c0_28, %c0_29, %67, %c0_30] : memref<1x4x8x8xbf16, #tpu.memory_space<vmem>>, vector<1x4x8x8xbf16>
      %69 = vector.shape_cast %68 : vector<1x4x8x8xbf16> to vector<4x8x8xbf16>
      "tpu.trace_start"() <{level = 10 : i32, message = "hqd,hkd->hqk"}> : () -> ()
      %cst_31 = arith.constant dense<0.000000e+00> : vector<4x8x8xf32>
      %70 = tpu.matmul %1, %66, %cst_31 {dimension_numbers = #tpu.dot_dimension_numbers<[2], [2], [1], [1], [0, 0, 0, 1, 1, 1], [0], [0]>} : vector<4x8x8xbf16>, vector<4x8x8xbf16>, vector<4x8x8xf32> -> vector<4x8x8xf32>
      "tpu.trace_stop"() : () -> ()
      %cst_32 = arith.constant dense<0xFF800000> : vector<4x8xf32>
      %71 = vector.multi_reduction <maximumf>, %70, %cst_32 [2] : vector<4x8x8xf32> to vector<4x8xf32>
      %72 = vector.shape_cast %71 : vector<4x8xf32> to vector<4x8x1xf32>
      %73 = arith.maximumf %arg9, %72 : vector<4x8x1xf32>
      %74 = arith.subf %arg9, %73 : vector<4x8x1xf32>
      %75 = math.exp %74 : vector<4x8x1xf32>
      %76 = vector.broadcast %73 : vector<4x8x1xf32> to vector<4x8x8xf32>
      %77 = arith.subf %70, %76 : vector<4x8x8xf32>
      %78 = math.exp %77 : vector<4x8x8xf32>
      %79 = arith.mulf %75, %arg10 : vector<4x8x1xf32>
      %cst_33 = arith.constant dense<0.000000e+00> : vector<4x8xf32>
      %80 = vector.multi_reduction <add>, %78, %cst_33 [2] : vector<4x8x8xf32> to vector<4x8xf32>
      %81 = vector.shape_cast %80 : vector<4x8xf32> to vector<4x8x1xf32>
      %82 = arith.addf %79, %81 : vector<4x8x1xf32>
      %83 = vector.broadcast %75 : vector<4x8x1xf32> to vector<4x8x8xf32>
      %84 = arith.mulf %83, %arg11 : vector<4x8x8xf32>
      %85 = arith.truncf %78 : vector<4x8x8xf32> to vector<4x8x8xbf16>
      "tpu.trace_start"() <{level = 10 : i32, message = "hqk,hkd->hqd"}> : () -> ()
      %cst_34 = arith.constant dense<0.000000e+00> : vector<4x8x8xf32>
      %86 = tpu.matmul %85, %69, %cst_34 {dimension_numbers = #tpu.dot_dimension_numbers<[2], [1], [1], [2], [0, 0, 0, 1, 1, 2], [0], [0]>} : vector<4x8x8xbf16>, vector<4x8x8xbf16>, vector<4x8x8xf32> -> vector<4x8x8xf32>
      "tpu.trace_stop"() : () -> ()
      %87 = arith.addf %84, %86 : vector<4x8x8xf32>
      scf.yield %73, %82, %87 : vector<4x8x1xf32>, vector<4x8x1xf32>, vector<4x8x8xf32>
    }
    %8 = tpu.iota {dimensions = array<i32: 1>} : vector<1x8x8xi32>
    %9 = tpu.iota {dimensions = array<i32: 2>} : vector<1x8x8xi32>
    %c8_i32 = arith.constant 8 : i32
    %10 = arith.muli %arg1, %c8_i32 : i32
    %11 = tpu.assume_multiple %10, 8 : i32
    %12 = arith.cmpi sle, %9, %8 : vector<1x8x8xi32>
    %c0_5 = arith.constant 0 : index
    %c0_6 = arith.constant 0 : index
    %13 = arith.index_cast %11 : i32 to index
    %c0_7 = arith.constant 0 : index
    %14 = vector.load %arg3[%c0_5, %c0_6, %13, %c0_7] : memref<1x4x8x8xbf16, #tpu.memory_space<vmem>>, vector<1x4x8x8xbf16>
    %15 = vector.shape_cast %14 : vector<1x4x8x8xbf16> to vector<4x8x8xbf16>
    %c0_8 = arith.constant 0 : index
    %c0_9 = arith.constant 0 : index
    %16 = arith.index_cast %11 : i32 to index
    %c0_10 = arith.constant 0 : index
    %17 = vector.load %arg4[%c0_8, %c0_9, %16, %c0_10] : memref<1x4x8x8xbf16, #tpu.memory_space<vmem>>, vector<1x4x8x8xbf16>
    %18 = vector.shape_cast %17 : vector<1x4x8x8xbf16> to vector<4x8x8xbf16>
    "tpu.trace_start"() <{level = 10 : i32, message = "hqd,hkd->hqk"}> : () -> ()
    %cst_11 = arith.constant dense<0.000000e+00> : vector<4x8x8xf32>
    %19 = tpu.matmul %1, %15, %cst_11 {dimension_numbers = #tpu.dot_dimension_numbers<[2], [2], [1], [1], [0, 0, 0, 1, 1, 1], [0], [0]>} : vector<4x8x8xbf16>, vector<4x8x8xbf16>, vector<4x8x8xf32> -> vector<4x8x8xf32>
    %cst_12 = arith.constant 0xFF800000 : f32
    "tpu.trace_stop"() : () -> ()
    %20 = vector.shape_cast %12 : vector<1x8x8xi1> to vector<1x8x8xi1>
    %21 = vector.broadcast %20 : vector<1x8x8xi1> to vector<4x8x8xi1>
    %22 = vector.broadcast %cst_12 : f32 to vector<4x8x8xf32>
    %23 = arith.select %21, %19, %22 : vector<4x8x8xi1>, vector<4x8x8xf32>
    %cst_13 = arith.constant dense<0xFF800000> : vector<4x8xf32>
    %24 = vector.multi_reduction <maximumf>, %23, %cst_13 [2] : vector<4x8x8xf32> to vector<4x8xf32>
    %25 = vector.shape_cast %24 : vector<4x8xf32> to vector<4x8x1xf32>
    %26 = arith.maximumf %7#0, %25 : vector<4x8x1xf32>
    %27 = arith.subf %7#0, %26 : vector<4x8x1xf32>
    %28 = math.exp %27 : vector<4x8x1xf32>
    %29 = vector.broadcast %26 : vector<4x8x1xf32> to vector<4x8x8xf32>
    %30 = arith.subf %23, %29 : vector<4x8x8xf32>
    %31 = math.exp %30 : vector<4x8x8xf32>
    %32 = arith.mulf %28, %7#1 : vector<4x8x1xf32>
    %cst_14 = arith.constant dense<0.000000e+00> : vector<4x8xf32>
    %33 = vector.multi_reduction <add>, %31, %cst_14 [2] : vector<4x8x8xf32> to vector<4x8xf32>
    %34 = vector.shape_cast %33 : vector<4x8xf32> to vector<4x8x1xf32>
    %35 = arith.addf %32, %34 : vector<4x8x1xf32>
    %36 = vector.broadcast %28 : vector<4x8x1xf32> to vector<4x8x8xf32>
    %37 = arith.mulf %36, %7#2 : vector<4x8x8xf32>
    %38 = arith.truncf %31 : vector<4x8x8xf32> to vector<4x8x8xbf16>
    "tpu.trace_start"() <{level = 10 : i32, message = "hqk,hkd->hqd"}> : () -> ()
    %cst_15 = arith.constant dense<0.000000e+00> : vector<4x8x8xf32>
    %39 = tpu.matmul %38, %18, %cst_15 {dimension_numbers = #tpu.dot_dimension_numbers<[2], [1], [1], [2], [0, 0, 0, 1, 1, 2], [0], [0]>} : vector<4x8x8xbf16>, vector<4x8x8xbf16>, vector<4x8x8xf32> -> vector<4x8x8xf32>
    "tpu.trace_stop"() : () -> ()
    %40 = arith.addf %37, %39 : vector<4x8x8xf32>
    %41 = tpu.reciprocal %35 {approx = true} : vector<4x8x1xf32> -> vector<4x8x1xf32>
    %42 = vector.broadcast %41 : vector<4x8x1xf32> to vector<4x8x8xf32>
    %43 = arith.mulf %40, %42 : vector<4x8x8xf32>
    %44 = arith.truncf %43 : vector<4x8x8xf32> to vector<4x8x8xbf16>
    %45 = vector.extract_strided_slice %44 {offsets = [0, 0, 0], sizes = [1, 8, 8], strides = [1, 1, 1]} : vector<4x8x8xbf16> to vector<1x8x8xbf16>
    %46 = vector.shape_cast %45 : vector<1x8x8xbf16> to vector<8x8xbf16>
    %47 = vector.extract_strided_slice %44 {offsets = [1, 0, 0], sizes = [1, 8, 8], strides = [1, 1, 1]} : vector<4x8x8xbf16> to vector<1x8x8xbf16>
    %48 = vector.shape_cast %47 : vector<1x8x8xbf16> to vector<8x8xbf16>
    %49 = vector.extract_strided_slice %44 {offsets = [2, 0, 0], sizes = [1, 8, 8], strides = [1, 1, 1]} : vector<4x8x8xbf16> to vector<1x8x8xbf16>
    %50 = vector.shape_cast %49 : vector<1x8x8xbf16> to vector<8x8xbf16>
    %51 = vector.extract_strided_slice %44 {offsets = [3, 0, 0], sizes = [1, 8, 8], strides = [1, 1, 1]} : vector<4x8x8xbf16> to vector<1x8x8xbf16>
    %52 = vector.shape_cast %51 : vector<1x8x8xbf16> to vector<8x8xbf16>
    %53 = tpu.concatenate %46, %48, %50, %52 in 1 : vector<8x8xbf16>, vector<8x8xbf16>, vector<8x8xbf16>, vector<8x8xbf16> -> vector<8x32xbf16>
    %c0_16 = arith.constant 0 : index
    %c0_17 = arith.constant 0 : index
    %54 = vector.load %arg5[%c0_16, %c0_17] : memref<32x32xbf16, #tpu.memory_space<vmem>>, vector<32x32xbf16>
    %cst_18 = arith.constant dense<0.000000e+00> : vector<8x32xf32>
    %55 = tpu.matmul %53, %54, %cst_18 {dimension_numbers = #tpu.dot_dimension_numbers<[1], [0], [0], [1], [0, 0, 1, 1], [], []>} : vector<8x32xbf16>, vector<32x32xbf16>, vector<8x32xf32> -> vector<8x32xf32>
    %c0_19 = arith.constant 0 : index
    %c0_20 = arith.constant 0 : index
    %56 = vector.load %arg6[%c0_19, %c0_20] : memref<1x32xf32, #tpu.memory_space<vmem>>, vector<1x32xf32>
    %57 = vector.broadcast %56 : vector<1x32xf32> to vector<8x32xf32>
    %58 = arith.addf %55, %57 : vector<8x32xf32>
    %c0_21 = arith.constant 0 : index
    %c0_22 = arith.constant 0 : index
    %c0_23 = arith.constant 0 : index
    %59 = vector.load %arg7[%c0_21, %c0_22, %c0_23] : memref<1x8x32xf32, #tpu.memory_space<vmem>>, vector<1x8x32xf32>
    %60 = vector.shape_cast %59 : vector<1x8x32xf32> to vector<8x32xf32>
    %61 = vector.shape_cast %58 : vector<8x32xf32> to vector<1x8x32xf32>
    tpu.vector_store %arg7[%c0_21, %c0_22, %c0_23], %61 {strides = array<i32>} : memref<1x8x32xf32, #tpu.memory_space<vmem>>, vector<1x8x32xf32>,
    return
  }
  func.func @transform_0(%arg0: i32, %arg1: i32) -> (i32, i32, i32, i32) {
    %c0_i32 = arith.constant 0 : i32
    %c0_i32_0 = arith.constant 0 : i32
    %c0_i32_1 = arith.constant 0 : i32
    return %arg0, %c0_i32, %arg1, %c0_i32_0 : i32, i32, i32, i32
  }
  func.func @transform_1(%arg0: i32, %arg1: i32) -> (i32, i32, i32, i32) {
    %c0_i32 = arith.constant 0 : i32
    %c0_i32_0 = arith.constant 0 : i32
    %c0_i32_1 = arith.constant 0 : i32
    %c0_i32_2 = arith.constant 0 : i32
    return %arg0, %c0_i32, %c0_i32_0, %c0_i32_1 : i32, i32, i32, i32
  }
  func.func @transform_2(%arg0: i32, %arg1: i32) -> (i32, i32, i32, i32) {
    %c0_i32 = arith.constant 0 : i32
    %c0_i32_0 = arith.constant 0 : i32
    %c0_i32_1 = arith.constant 0 : i32
    %c0_i32_2 = arith.constant 0 : i32
    return %arg0, %c0_i32, %c0_i32_0, %c0_i32_1 : i32, i32, i32, i32
  }
  func.func @transform_3(%arg0: i32, %arg1: i32) -> (i32, i32) {
    %c0_i32 = arith.constant 0 : i32
    %c0_i32_0 = arith.constant 0 : i32
    %c0_i32_1 = arith.constant 0 : i32
    return %c0_i32, %c0_i32_0 : i32, i32
  }
  func.func @transform_4(%arg0: i32, %arg1: i32) -> (i32, i32) {
    %c0_i32 = arith.constant 0 : i32
    %c0_i32_0 = arith.constant 0 : i32
    %c0_i32_1 = arith.constant 0 : i32
    return %c0_i32, %c0_i32_0 : i32, i32
  }
  func.func @transform_5(%arg0: i32, %arg1: i32) -> (i32, i32, i32) {
    %c0_i32 = arith.constant 0 : i32
    %c0_i32_0 = arith.constant 0 : i32
    return %arg0, %arg1, %c0_i32 : i32, i32, i32
  }
}

</mosaic_0001>

<llo_original>
// kernel: tpu_custom_call.1
$region0: #{tpu_custom_call.1}
  #allocation0 [shape = 'u32[]', space=smem, size = 0x4, offset = 0x4, fixed_abs, tag = 'smem constant byte address 0x4 - core index']
  #allocation1 [shape = 'u32[144,128]{1,0:T(1,128)}', space=vmem, size = 0x12000, scoped, tag = 'internal scratch']
  %s0 = inlined_call_operand.hbm [shape: bf16[2,4,8,8], index: 0, kind: input, shape index: {}]
  %s1 = inlined_call_operand.hbm [shape: bf16[2,4,8,8], index: 1, kind: input, shape index: {}]
  %s2 = inlined_call_operand.hbm [shape: bf16[2,4,8,8], index: 2, kind: input, shape index: {}]
  %s3 = inlined_call_operand.hbm [shape: bf16[32,32], index: 3, kind: input, shape index: {}]
  %s4 = inlined_call_operand.vmem [shape: f32[1,32], index: 4, kind: input, shape index: {}]
  %s5 = inlined_call_operand.hbm [shape: f32[2,8,32], index: 5, kind: output, shape index: {}]
  %s6 = sld [smem:[#allocation0]]
  $region76: #{tpu_custom_call.1} parent=0
    _
  %s8 = ssub.s32 1, %s6
  %s9 = scalar_select 0, %s8, %s6
  $region1: #{tpu_custom_call.1} parent=0
    #allocation2 [shape = 'u8[16384]{0}', space=vmem, size = 0x4000, scoped, tag = 'input window, operand 0']
    #allocation3 [shape = 's32[2]{0}', space=sflag, size = 0x8, scoped, tag = 'scoped memory for tpu_custom_call.1']
    #allocation4 [shape = 's32[2]{0}', space=sflag, size = 0x8, scoped, tag = 'scoped memory for tpu_custom_call.1']
    #allocation5 [shape = 'u8[16384]{0}', space=vmem, size = 0x4000, scoped, tag = 'input window, operand 1']
    #allocation6 [shape = 's32[2]{0}', space=sflag, size = 0x8, scoped, tag = 'scoped memory for tpu_custom_call.1']
    #allocation7 [shape = 'u8[16384]{0}', space=vmem, size = 0x4000, scoped, tag = 'input window, operand 2']
    #allocation8 [shape = 'u8[8192]{0}', space=vmem, size = 0x2000, scoped, tag = 'input window, operand 3, single buffered']
    #allocation9 [shape = 's32[1]{0}', space=sflag, size = 0x4, scoped, tag = 'scoped memory for tpu_custom_call.1']
    #allocation10 [shape = 'u8[8192]{0}', space=vmem, size = 0x2000, scoped, tag = 'output window, operand 0']
    %10 = vsyncpa [#allocation3], 0
    %s11 = scalar_lea.sflag [#allocation3], 1
    %12 = vsyncpa %s11, 0
    %13 = vsyncpa [#allocation6], 0
    %s14 = scalar_lea.sflag [#allocation6], 1
    %15 = vsyncpa %s14, 0
    %16 = vsyncpa [#allocation9], 0
    %17 = vsyncpa [#allocation4], 0
    %s18 = scalar_lea.sflag [#allocation4], 1
    %19 = vsyncpa %s18, 0
    loop: start=0, step=1, limit=4
    $region2: #{tpu_custom_call.1} parent=1 // loop_pre_header
      _
    $region3: #{tpu_custom_call.1} parent=1 // loop_header
      %s21 = sphi 0, %s25
      %p22 = scmp.ge.s32.totalorder %s21, 4
      %s28 = sphi 0, %s40
      %s29 = sphi 0, %s36
      %s30 = sphi 0, %s28
      %s31 = sphi 0, %s29
      %s32 = sphi 0, %s30
      %s33 = sphi 0, %s31
      %s45 = sphi 0, %s47
      %s48 = sphi 0, %s45
      %s49 = sphi 0, %s48
      %s65 = sphi 0, %s49
      %s71 = sphi 0, %s73
      %s74 = sphi 0, %s71
      %s75 = sphi 0, %s74
      %s91 = sphi 0, %s75
      %s97 = sphi 0, %s99
      %s100 = sphi 0, %s97
      %s101 = sphi 0, %s100
      %s117 = sphi 0, %s101
      %s121 = sphi 0, %s121
      %s123 = sphi 0, %s121
      %s124 = sphi 0, %s123
      %s138 = sphi 0, %s124
      %s142 = sphi 0, %s142
      %s144 = sphi 0, %s142
      %s145 = sphi 0, %s144
      %s159 = sphi 0, %s145
      %s167 = sphi 0, %s169
      %s170 = sphi 0, %s167
      %s171 = sphi 0, %s170
      %s187 = sphi 0, %s171
    $region4: #{tpu_custom_call.1} parent=1 // loop_header_branch
      %24 = sbr.rel (%p22) target = $region8
    $region5: #{tpu_custom_call.1} parent=1 // loop_body
      %s26 = ssub.s32 %s21, 1
      %s27 = ssub.s32 %s21, 2
      %s34 = sadd.s32 1, %s29
      %p35 = scmp.ge.s32.totalorder %s34, 1
      %s36 = scalar_select %p35, 0, %s34
      %s37 = sadd.s32 1, %s28
      %s38 = scalar_select %p35, %s37, %s28
      %p39 = scmp.ge.s32.totalorder %s38, 2
      %s40 = scalar_select %p39, 0, %s38
      %s41 = ssub.s32 %s28, %s40
      %s42 = ssub.s32 %s29, %s36
      %s43 = sor.u32 %s41, %s42
      %p44 = scmp.eq.s32.totalorder %s43, 0
      %s46 = sadd.s32 %s45, 1
      %s47 = scalar_select %p44, %s45, %s46
      %p50 = pneg %p44
      %p51 = scmp.eq.s32.totalorder %s21, 1
      %p52 = por %p50, %p51
      %p53 = scmp.ne.s32.totalorder %s45, %s48
      %p54 = scmp.eq.s32.totalorder %s21, 0
      %p55 = por %p53, %p54
      %p56 = scmp.ne.s32.totalorder %s45, %s48
      %p57 = scmp.eq.s32.totalorder %s26, 1
      %p58 = por %p56, %p57
      %p59 = scmp.ne.s32.totalorder %s48, %s49
      %p60 = scmp.eq.s32.totalorder %s26, 0
      %p61 = por %p59, %p60
      %p62 = scmp.ne.s32.totalorder %s48, %s49
      %p63 = scmp.eq.s32.totalorder %s27, 1
      %p64 = por %p62, %p63
      %p66 = scmp.ne.s32.totalorder %s49, %s65
      %p67 = scmp.eq.s32.totalorder %s27, 0
      %p68 = por %p66, %p67
      %s69 = ssub.s32 %s28, %s40
      %p70 = scmp.eq.s32.totalorder %s69, 0
      %s72 = sadd.s32 %s71, 1
      %s73 = scalar_select %p70, %s71, %s72
      %p76 = pneg %p70
      %p77 = scmp.eq.s32.totalorder %s21, 1
      %p78 = por %p76, %p77
      %p79 = scmp.ne.s32.totalorder %s71, %s74
      %p80 = scmp.eq.s32.totalorder %s21, 0
      %p81 = por %p79, %p80
      %p82 = scmp.ne.s32.totalorder %s71, %s74
      %p83 = scmp.eq.s32.totalorder %s26, 1
      %p84 = por %p82, %p83
      %p85 = scmp.ne.s32.totalorder %s74, %s75
      %p86 = scmp.eq.s32.totalorder %s26, 0
      %p87 = por %p85, %p86
      %p88 = scmp.ne.s32.totalorder %s74, %s75
      %p89 = scmp.eq.s32.totalorder %s27, 1
      %p90 = por %p88, %p89
      %p92 = scmp.ne.s32.totalorder %s75, %s91
      %p93 = scmp.eq.s32.totalorder %s27, 0
      %p94 = por %p92, %p93
      %s95 = ssub.s32 %s28, %s40
      %p96 = scmp.eq.s32.totalorder %s95, 0
      %s98 = sadd.s32 %s97, 1
      %s99 = scalar_select %p96, %s97, %s98
      %p102 = pneg %p96
      %p103 = scmp.eq.s32.totalorder %s21, 1
      %p104 = por %p102, %p103
      %p105 = scmp.ne.s32.totalorder %s97, %s100
      %p106 = scmp.eq.s32.totalorder %s21, 0
      %p107 = por %p105, %p106
      %p108 = scmp.ne.s32.totalorder %s97, %s100
      %p109 = scmp.eq.s32.totalorder %s26, 1
      %p110 = por %p108, %p109
      %p111 = scmp.ne.s32.totalorder %s100, %s101
      %p112 = scmp.eq.s32.totalorder %s26, 0
      %p113 = por %p111, %p112
      %p114 = scmp.ne.s32.totalorder %s100, %s101
      %p115 = scmp.eq.s32.totalorder %s27, 1
      %p116 = por %p114, %p115
      %p118 = scmp.ne.s32.totalorder %s101, %s117
      %p119 = scmp.eq.s32.totalorder %s27, 0
      %p120 = por %p118, %p119
      %s122 = sadd.s32 %s121, 1
      %p125 = scmp.eq.s32.totalorder %s21, 1
      %p126 = scmp.ne.s32.totalorder %s121, %s123
      %p127 = scmp.eq.s32.totalorder %s21, 0
      %p128 = por %p126, %p127
      %p129 = scmp.ne.s32.totalorder %s121, %s123
      %p130 = scmp.eq.s32.totalorder %s26, 1
      %p131 = por %p129, %p130
      %p132 = scmp.ne.s32.totalorder %s123, %s124
      %p133 = scmp.eq.s32.totalorder %s26, 0
      %p134 = por %p132, %p133
      %p135 = scmp.ne.s32.totalorder %s123, %s124
      %p136 = scmp.eq.s32.totalorder %s27, 1
      %p137 = por %p135, %p136
      %p139 = scmp.ne.s32.totalorder %s124, %s138
      %p140 = scmp.eq.s32.totalorder %s27, 0
      %p141 = por %p139, %p140
      %s143 = sadd.s32 %s142, 1
      %p146 = scmp.eq.s32.totalorder %s21, 1
      %p147 = scmp.ne.s32.totalorder %s142, %s144
      %p148 = scmp.eq.s32.totalorder %s21, 0
      %p149 = por %p147, %p148
      %p150 = scmp.ne.s32.totalorder %s142, %s144
      %p151 = scmp.eq.s32.totalorder %s26, 1
      %p152 = por %p150, %p151
      %p153 = scmp.ne.s32.totalorder %s144, %s145
      %p154 = scmp.eq.s32.totalorder %s26, 0
      %p155 = por %p153, %p154
      %p156 = scmp.ne.s32.totalorder %s144, %s145
      %p157 = scmp.eq.s32.totalorder %s27, 1
      %p158 = por %p156, %p157
      %p160 = scmp.ne.s32.totalorder %s145, %s159
      %p161 = scmp.eq.s32.totalorder %s27, 0
      %p162 = por %p160, %p161
      %s163 = ssub.s32 %s28, %s40
      %s164 = ssub.s32 %s29, %s36
      %s165 = sor.u32 %s163, %s164
      %p166 = scmp.eq.s32.totalorder %s165, 0
      %s168 = sadd.s32 %s167, 1
      %s169 = scalar_select %p166, %s167, %s168
      %p172 = pneg %p166
      %p173 = scmp.eq.s32.totalorder %s21, 1
      %p174 = por %p172, %p173
      %p175 = scmp.ne.s32.totalorder %s167, %s170
      %p176 = scmp.eq.s32.totalorder %s21, 0
      %p177 = por %p175, %p176
      %p178 = scmp.ne.s32.totalorder %s167, %s170
      %p179 = scmp.eq.s32.totalorder %s26, 1
      %p180 = por %p178, %p179
      %p181 = scmp.ne.s32.totalorder %s170, %s171
      %p182 = scmp.eq.s32.totalorder %s26, 0
      %p183 = por %p181, %p182
      %p184 = scmp.ne.s32.totalorder %s170, %s171
      %p185 = scmp.eq.s32.totalorder %s27, 1
      %p186 = por %p184, %p185
      %p188 = scmp.ne.s32.totalorder %s171, %s187
      %p189 = scmp.eq.s32.totalorder %s27, 0
      %p190 = por %p188, %p189
      %p191 = scmp.le.s32.totalorder 1, %s21
      %p192 = scmp.lt.s32.totalorder %s21, 3
      %p193 = pnand %p191, %p192
      %p194 = pneg %p193
      // Predicated region
      $region9: #{tpu_custom_call.1} parent=5 // pred_check
        _
      $region10: #{tpu_custom_call.1} parent=5 // pred_check_branch
        %196 = sbr.rel (%p193) target = $region12
      $region11: #{tpu_custom_call.1} parent=5 // pred_region
        %s197 = ssub.s32 %s21, 1
        // Predicated region
        $region13: #{tpu_custom_call.1} parent=11 // pred_check
          %p198 = pneg %p134
        $region14: #{tpu_custom_call.1} parent=11 // pred_check_branch
          %200 = sbr.rel (%p198) target = $region16
        $region15: #{tpu_custom_call.1} parent=11 // pred_region
          %s202 = ssub.s32 256, 256
          %203 = vsyncadd [#allocation9], %s202
          %s204 = sshll.u32 [#allocation8], 4
          %s205 = int_to_ptr.vmem [resolvable:$true] %s204
          %210 = dma.hbm_to_vmem [thread:$0]  %s3, 256, %s205, [#allocation9], 64, 64, 4
        $region16: #{tpu_custom_call.1} parent=11 // pred_fallthru
          _
        // Predicated region
        $region17: #{tpu_custom_call.1} parent=11 // pred_check
          %p211 = pneg %p155
        $region18: #{tpu_custom_call.1} parent=11 // pred_check_branch
          %213 = sbr.rel (%p211) target = $region20
        $region19: #{tpu_custom_call.1} parent=11 // pred_region
          _
        $region20: #{tpu_custom_call.1} parent=11 // pred_fallthru
          _
      $region12: #{tpu_custom_call.1} parent=5 // pred_fallthru
        _
      %p214 = scmp.lt.s32.totalorder %s21, 2
      // Predicated region
      $region21: #{tpu_custom_call.1} parent=5 // pred_check
        %p215 = pneg %p214
      $region22: #{tpu_custom_call.1} parent=5 // pred_check_branch
        %217 = sbr.rel (%p215) target = $region24
      $region23: #{tpu_custom_call.1} parent=5 // pred_region
        // Predicated region
        $region25: #{tpu_custom_call.1} parent=23 // pred_check
          %p218 = pneg %p55
        $region26: #{tpu_custom_call.1} parent=23 // pred_check_branch
          %220 = sbr.rel (%p218) target = $region28
        $region27: #{tpu_custom_call.1} parent=23 // pred_region
          %s221 = sand.u32 %s45, 1
          %s222 = scalar_lea.sflag [#allocation3], %s221
          %s223 = sand.u32 %s45, 1
          %s224 = smul.addr %s223, 16
          %s225 = scalar_lea.vmem [#allocation2], %s224
          %s227 = ssub.s32 256, 256
          %228 = vsyncadd %s222, %s227
          %s229 = smul.addr %s28, 4
          %s230 = sadd.s32 %s29, %s229
          %s231 = smul.addr %s230, 64
          %s232 = scalar_lea.hbm %s0, %s231
          %s233 = sshll.u32 %s225, 4
          %s234 = int_to_ptr.vmem [resolvable:$true] %s233
          %239 = dma.hbm_to_vmem [thread:$0]  %s232, 256, %s234, %s222, 64, 64, 4
        $region28: #{tpu_custom_call.1} parent=23 // pred_fallthru
          _
        // Predicated region
        $region29: #{tpu_custom_call.1} parent=23 // pred_check
          %p240 = pneg %p81
        $region30: #{tpu_custom_call.1} parent=23 // pred_check_branch
          %242 = sbr.rel (%p240) target = $region32
        $region31: #{tpu_custom_call.1} parent=23 // pred_region
          %s243 = sand.u32 %s21, 1
          %s244 = scalar_lea.sflag [#allocation6], %s243
          %s245 = sand.u32 %s71, 1
          %s246 = smul.addr %s245, 16
          %s247 = scalar_lea.vmem [#allocation5], %s246
          %s249 = ssub.s32 256, 256
          %250 = vsyncadd %s244, %s249
          %s251 = smul.addr %s28, 4
          %s252 = smul.addr %s251, 64
          %s253 = scalar_lea.hbm %s1, %s252
          %s254 = sshll.u32 %s247, 4
          %s255 = int_to_ptr.vmem [resolvable:$true] %s254
          %260 = dma.hbm_to_vmem [thread:$0]  %s253, 256, %s255, %s244, 64, 64, 4
        $region32: #{tpu_custom_call.1} parent=23 // pred_fallthru
          _
        // Predicated region
        $region33: #{tpu_custom_call.1} parent=23 // pred_check
          %p261 = pneg %p107
        $region34: #{tpu_custom_call.1} parent=23 // pred_check_branch
          %263 = sbr.rel (%p261) target = $region36
        $region35: #{tpu_custom_call.1} parent=23 // pred_region
          %s264 = sand.u32 %s21, 1
          %s265 = scalar_lea.sflag [#allocation6], %s264
          %s266 = sand.u32 %s97, 1
          %s267 = smul.addr %s266, 16
          %s268 = scalar_lea.vmem [#allocation7], %s267
          %s270 = ssub.s32 256, 256
          %271 = vsyncadd %s265, %s270
          %s272 = smul.addr %s28, 4
          %s273 = smul.addr %s272, 64
          %s274 = scalar_lea.hbm %s2, %s273
          %s275 = sshll.u32 %s268, 4
          %s276 = int_to_ptr.vmem [resolvable:$true] %s275
          %281 = dma.hbm_to_vmem [thread:$0]  %s274, 256, %s276, %s265, 64, 64, 4
        $region36: #{tpu_custom_call.1} parent=23 // pred_fallthru
          _
      $region24: #{tpu_custom_call.1} parent=5 // pred_fallthru
        _
      %p282 = scmp.le.s32.totalorder 1, %s21
      %p283 = scmp.lt.s32.totalorder %s21, 3
      %p284 = pnand %p282, %p283
      %p285 = pneg %p284
      // Predicated region
      $region37: #{tpu_custom_call.1} parent=5 // pred_check
        _
      $region38: #{tpu_custom_call.1} parent=5 // pred_check_branch
        %287 = sbr.rel (%p284) target = $region40
      $region39: #{tpu_custom_call.1} parent=5 // pred_region
        %s288 = ssub.s32 %s21, 1
        %s289 = sand.u32 %s48, 1
        %s290 = scalar_lea.sflag [#allocation3], %s289
        %s291 = sand.u32 %s48, 1
        %s292 = smul.addr %s291, 16
        %s293 = scalar_lea.vmem [#allocation2], %s292
        // Predicated region
        $region41: #{tpu_custom_call.1} parent=39 // pred_check
          %p294 = pneg %p61
        $region42: #{tpu_custom_call.1} parent=39 // pred_check_branch
          %296 = sbr.rel (%p294) target = $region44
        $region43: #{tpu_custom_call.1} parent=39 // pred_region
          %297 = dma.done %s290, 256
        $region44: #{tpu_custom_call.1} parent=39 // pred_fallthru
          _
        %s298 = sand.u32 %s26, 1
        %s299 = scalar_lea.sflag [#allocation6], %s298
        %s300 = sand.u32 %s74, 1
        %s301 = smul.addr %s300, 16
        %s302 = scalar_lea.vmem [#allocation5], %s301
        // Predicated region
        $region45: #{tpu_custom_call.1} parent=39 // pred_check
          %p303 = pneg %p87
        $region46: #{tpu_custom_call.1} parent=39 // pred_check_branch
          %305 = sbr.rel (%p303) target = $region48
        $region47: #{tpu_custom_call.1} parent=39 // pred_region
          %306 = dma.done %s299, 256
        $region48: #{tpu_custom_call.1} parent=39 // pred_fallthru
          _
        %s307 = sand.u32 %s26, 1
        %s308 = scalar_lea.sflag [#allocation6], %s307
        %s309 = sand.u32 %s100, 1
        %s310 = smul.addr %s309, 16
        %s311 = scalar_lea.vmem [#allocation7], %s310
        // Predicated region
        $region49: #{tpu_custom_call.1} parent=39 // pred_check
          %p312 = pneg %p113
        $region50: #{tpu_custom_call.1} parent=39 // pred_check_branch
          %314 = sbr.rel (%p312) target = $region52
        $region51: #{tpu_custom_call.1} parent=39 // pred_region
          %315 = dma.done %s308, 256
        $region52: #{tpu_custom_call.1} parent=39 // pred_fallthru
          _
        // Predicated region
        $region53: #{tpu_custom_call.1} parent=39 // pred_check
          %p316 = pneg %p134
        $region54: #{tpu_custom_call.1} parent=39 // pred_check_branch
          %318 = sbr.rel (%p316) target = $region56
        $region55: #{tpu_custom_call.1} parent=39 // pred_region
          %319 = dma.done [#allocation9], 256
        $region56: #{tpu_custom_call.1} parent=39 // pred_fallthru
          _
        %s320 = sand.u32 %s48, 1
        %s321 = scalar_lea.sflag [#allocation3], %s320
        %s322 = sand.u32 %s48, 1
        %s323 = smul.addr %s322, 16
        %s324 = scalar_lea.vmem [#allocation2], %s323
        %p325 = pneg %p61
        %p326 = pneg %p58
        %s327 = sand.u32 %s26, 1
        %s328 = scalar_lea.sflag [#allocation6], %s327
        %s329 = sand.u32 %s74, 1
        %s330 = smul.addr %s329, 16
        %s331 = scalar_lea.vmem [#allocation5], %s330
        %p332 = pneg %p87
        %p333 = pneg %p84
        %s334 = sand.u32 %s26, 1
        %s335 = scalar_lea.sflag [#allocation6], %s334
        %s336 = sand.u32 %s100, 1
        %s337 = smul.addr %s336, 16
        %s338 = scalar_lea.vmem [#allocation7], %s337
        %p339 = pneg %p113
        %p340 = pneg %p110
        %p341 = pneg %p134
        %p342 = pneg %p131
        %p343 = pneg %p155
        %p344 = pneg %p152
        %p345 = pneg %p183
        %p346 = pneg %p180
        %s347 = sand.u32 %s170, 1
        %s348 = scalar_lea.sflag [#allocation4], %s347
        %s349 = sand.u32 %s170, 1
        %s350 = smul.addr %s349, 8
        %s351 = scalar_lea.vmem [#allocation10], %s350
        %v353 = vld [vmem:[%s293] sm:$0xf]
        %v354 = vld [vmem:[%s293 + $0x4] sm:$0xf]
        %v355 = vld [vmem:[%s293 + $0x8] sm:$0xf]
        %v356 = vld [vmem:[%s293 + $0xc] sm:$0xf]
        // While loop
        $region57: #{tpu_custom_call.1} parent=39 // loop_pre_header
          _
        $region58: #{tpu_custom_call.1} parent=39 // loop_header
          %s358 = sphi 0, %s360
          %p359 = scmp.ge.s32.totalorder %s358, %s31
          %v363 = vphi -inf, %v587
          %v364 = vphi -inf, %v588
          %v365 = vphi -inf, %v589
          %v366 = vphi -inf, %v590
          %v367 = vphi 0.0, %v631
          %v368 = vphi 0.0, %v632
          %v369 = vphi 0.0, %v633
          %v370 = vphi 0.0, %v634
          %v371 = vphi 0.0, %v828
          %v372 = vphi 0.0, %v829
          %v373 = vphi 0.0, %v830
          %v374 = vphi 0.0, %v831
        $region59: #{tpu_custom_call.1} parent=39 // loop_header_branch
          %362 = sbr.rel (%p359) target = $region63
        $region60: #{tpu_custom_call.1} parent=39 // loop_body
          %s375 = smul.u32 %s358, 8
          %s376 = sshra.s32 %s375, 3
          %s377 = sand.u32 %s375, 7
          %s378 = smul.addr %s376, 4
          %s379 = scalar_lea.vmem %s302, %s378 [#allocation5]
          %v380 = vld [vmem:[%s379] sm:$0xf]
          %v381 = vld [vmem:[%s379 + $0x4] sm:$0xf]
          %v382 = vld [vmem:[%s379 + $0x8] sm:$0xf]
          %v383 = vld [vmem:[%s379 + $0xc] sm:$0xf]
          %s384 = smul.addr %s376, 4
          %s385 = scalar_lea.vmem %s311, %s384 [#allocation7]
          %v386 = vld [vmem:[%s385] sm:$0xf]
          %v387 = vld [vmem:[%s385 + $0x4] sm:$0xf]
          %v388 = vld [vmem:[%s385 + $0x8] sm:$0xf]
          %v389 = vld [vmem:[%s385 + $0xc] sm:$0xf]
          %vm390 = vcmask 64512
          %v392 = vsel %vm390, %v353, 0
          %v395 = vsel %vm390, %v380, 0
          %397 = vmatprep.subr.bf16.mxu0 0
          %398 = vmatpush1.bf16.xpose.msra.mxu0 0
          %399 = vmatprep.subr.bf16.mxu0 0
          %400 = vmatpush1.bf16.xpose.msra.mxu0 0
          %401 = vmatprep.subr.bf16.mxu0 0
          %402 = vmatpush1.bf16.xpose.msra.mxu0 0
          %403 = vmatprep.subr.bf16.mxu0 0
          %404 = vmatpush1.bf16.xpose.msra.mxu0 0
          %405 = vmatprep.subr.bf16.mxu0 0
          %406 = vmatpush1.bf16.xpose.msra.mxu0 0
          %407 = vmatprep.subr.bf16.mxu0 0
          %408 = vmatpush1.bf16.xpose.msra.mxu0 0
          %409 = vmatprep.subr.bf16.mxu0 0
          %410 = vmatpush1.bf16.xpose.msra.mxu0 0
          %411 = vmatprep.subr.bf16.mxu0 0
          %412 = vmatpush1.bf16.xpose.msra.mxu0 %v395
          %413 = vmatprep.subr.bf16.mxu0 0
          %414 = vmatpush2.bf16.xpose.msra.mxu0 0
          %415 = vmatprep.subr.bf16.mxu0 0
          %416 = vmatpush2.bf16.xpose.msra.mxu0 0
          %417 = vmatprep.subr.bf16.mxu0 0
          %418 = vmatpush2.bf16.xpose.msra.mxu0 0
          %419 = vmatprep.subr.bf16.mxu0 0
          %420 = vmatpush2.bf16.xpose.msra.mxu0 0
          %421 = vmatprep.subr.bf16.mxu0 0
          %422 = vmatpush2.bf16.xpose.msra.mxu0 0
          %423 = vmatprep.subr.bf16.mxu0 0
          %424 = vmatpush2.bf16.xpose.msra.mxu0 0
          %425 = vmatprep.subr.bf16.mxu0 0
          %426 = vmatpush2.bf16.xpose.msra.mxu0 0
          %427 = vmatprep.subr.bf16.mxu0 0
          %428 = vmatpush2.bf16.xpose.msra.mxu0 0
          %429 = vmatprep.mubr.bf16.mxu0 0
          %430 = vmatmul.mubr.bf16.gmra.mxu0 %v392
          %v431 = vpop.f32.mrf.mxu0
          %v432 = vadd.f32 0.0, %v431
          %v433 = vpop.f32.mrf.mxu0
          %v434 = vpop.f32.mrf.mxu0
          %v435 = vpop.f32.mrf.mxu0
          %436 = vdwg.mxu0
          %v438 = vsel %vm390, %v354, 0
          %v441 = vsel %vm390, %v381, 0
          %443 = vmatprep.subr.bf16.mxu0 0
          %444 = vmatpush1.bf16.xpose.msra.mxu0 0
          %445 = vmatprep.subr.bf16.mxu0 0
          %446 = vmatpush1.bf16.xpose.msra.mxu0 0
          %447 = vmatprep.subr.bf16.mxu0 0
          %448 = vmatpush1.bf16.xpose.msra.mxu0 0
          %449 = vmatprep.subr.bf16.mxu0 0
          %450 = vmatpush1.bf16.xpose.msra.mxu0 0
          %451 = vmatprep.subr.bf16.mxu0 0
          %452 = vmatpush1.bf16.xpose.msra.mxu0 0
          %453 = vmatprep.subr.bf16.mxu0 0
          %454 = vmatpush1.bf16.xpose.msra.mxu0 0
          %455 = vmatprep.subr.bf16.mxu0 0
          %456 = vmatpush1.bf16.xpose.msra.mxu0 0
          %457 = vmatprep.subr.bf16.mxu0 0
          %458 = vmatpush1.bf16.xpose.msra.mxu0 %v441
          %459 = vmatprep.subr.bf16.mxu0 0
          %460 = vmatpush2.bf16.xpose.msra.mxu0 0
          %461 = vmatprep.subr.bf16.mxu0 0
          %462 = vmatpush2.bf16.xpose.msra.mxu0 0
          %463 = vmatprep.subr.bf16.mxu0 0
          %464 = vmatpush2.bf16.xpose.msra.mxu0 0
          %465 = vmatprep.subr.bf16.mxu0 0
          %466 = vmatpush2.bf16.xpose.msra.mxu0 0
          %467 = vmatprep.subr.bf16.mxu0 0
          %468 = vmatpush2.bf16.xpose.msra.mxu0 0
          %469 = vmatprep.subr.bf16.mxu0 0
          %470 = vmatpush2.bf16.xpose.msra.mxu0 0
          %471 = vmatprep.subr.bf16.mxu0 0
          %472 = vmatpush2.bf16.xpose.msra.mxu0 0
          %473 = vmatprep.subr.bf16.mxu0 0
          %474 = vmatpush2.bf16.xpose.msra.mxu0 0
          %475 = vmatprep.mubr.bf16.mxu0 0
          %476 = vmatmul.mubr.bf16.gmra.mxu0 %v438
          %v477 = vpop.f32.mrf.mxu0
          %v478 = vadd.f32 0.0, %v477
          %v479 = vpop.f32.mrf.mxu0
          %v480 = vpop.f32.mrf.mxu0
          %v481 = vpop.f32.mrf.mxu0
          %482 = vdwg.mxu0
          %v484 = vsel %vm390, %v355, 0
          %v487 = vsel %vm390, %v382, 0
          %489 = vmatprep.subr.bf16.mxu0 0
          %490 = vmatpush1.bf16.xpose.msra.mxu0 0
          %491 = vmatprep.subr.bf16.mxu0 0
          %492 = vmatpush1.bf16.xpose.msra.mxu0 0
          %493 = vmatprep.subr.bf16.mxu0 0
          %494 = vmatpush1.bf16.xpose.msra.mxu0 0
          %495 = vmatprep.subr.bf16.mxu0 0
          %496 = vmatpush1.bf16.xpose.msra.mxu0 0
          %497 = vmatprep.subr.bf16.mxu0 0
          %498 = vmatpush1.bf16.xpose.msra.mxu0 0
          %499 = vmatprep.subr.bf16.mxu0 0
          %500 = vmatpush1.bf16.xpose.msra.mxu0 0
          %501 = vmatprep.subr.bf16.mxu0 0
          %502 = vmatpush1.bf16.xpose.msra.mxu0 0
          %503 = vmatprep.subr.bf16.mxu0 0
          %504 = vmatpush1.bf16.xpose.msra.mxu0 %v487
          %505 = vmatprep.subr.bf16.mxu0 0
          %506 = vmatpush2.bf16.xpose.msra.mxu0 0
          %507 = vmatprep.subr.bf16.mxu0 0
          %508 = vmatpush2.bf16.xpose.msra.mxu0 0
          %509 = vmatprep.subr.bf16.mxu0 0
          %510 = vmatpush2.bf16.xpose.msra.mxu0 0
          %511 = vmatprep.subr.bf16.mxu0 0
          %512 = vmatpush2.bf16.xpose.msra.mxu0 0
          %513 = vmatprep.subr.bf16.mxu0 0
          %514 = vmatpush2.bf16.xpose.msra.mxu0 0
          %515 = vmatprep.subr.bf16.mxu0 0
          %516 = vmatpush2.bf16.xpose.msra.mxu0 0
          %517 = vmatprep.subr.bf16.mxu0 0
          %518 = vmatpush2.bf16.xpose.msra.mxu0 0
          %519 = vmatprep.subr.bf16.mxu0 0
          %520 = vmatpush2.bf16.xpose.msra.mxu0 0
          %521 = vmatprep.mubr.bf16.mxu0 0
          %522 = vmatmul.mubr.bf16.gmra.mxu0 %v484
          %v523 = vpop.f32.mrf.mxu0
          %v524 = vadd.f32 0.0, %v523
          %v525 = vpop.f32.mrf.mxu0
          %v526 = vpop.f32.mrf.mxu0
          %v527 = vpop.f32.mrf.mxu0
          %528 = vdwg.mxu0
          %v530 = vsel %vm390, %v356, 0
          %v533 = vsel %vm390, %v383, 0
          %535 = vmatprep.subr.bf16.mxu0 0
          %536 = vmatpush1.bf16.xpose.msra.mxu0 0
          %537 = vmatprep.subr.bf16.mxu0 0
          %538 = vmatpush1.bf16.xpose.msra.mxu0 0
          %539 = vmatprep.subr.bf16.mxu0 0
          %540 = vmatpush1.bf16.xpose.msra.mxu0 0
          %541 = vmatprep.subr.bf16.mxu0 0
          %542 = vmatpush1.bf16.xpose.msra.mxu0 0
          %543 = vmatprep.subr.bf16.mxu0 0
          %544 = vmatpush1.bf16.xpose.msra.mxu0 0
          %545 = vmatprep.subr.bf16.mxu0 0
          %546 = vmatpush1.bf16.xpose.msra.mxu0 0
          %547 = vmatprep.subr.bf16.mxu0 0
          %548 = vmatpush1.bf16.xpose.msra.mxu0 0
          %549 = vmatprep.subr.bf16.mxu0 0
          %550 = vmatpush1.bf16.xpose.msra.mxu0 %v533
          %551 = vmatprep.subr.bf16.mxu0 0
          %552 = vmatpush2.bf16.xpose.msra.mxu0 0
          %553 = vmatprep.subr.bf16.mxu0 0
          %554 = vmatpush2.bf16.xpose.msra.mxu0 0
          %555 = vmatprep.subr.bf16.mxu0 0
          %556 = vmatpush2.bf16.xpose.msra.mxu0 0
          %557 = vmatprep.subr.bf16.mxu0 0
          %558 = vmatpush2.bf16.xpose.msra.mxu0 0
          %559 = vmatprep.subr.bf16.mxu0 0
          %560 = vmatpush2.bf16.xpose.msra.mxu0 0
          %561 = vmatprep.subr.bf16.mxu0 0
          %562 = vmatpush2.bf16.xpose.msra.mxu0 0
          %563 = vmatprep.subr.bf16.mxu0 0
          %564 = vmatpush2.bf16.xpose.msra.mxu0 0
          %565 = vmatprep.subr.bf16.mxu0 0
          %566 = vmatpush2.bf16.xpose.msra.mxu0 0
          %567 = vmatprep.mubr.bf16.mxu0 0
          %568 = vmatmul.mubr.bf16.gmra.mxu0 %v530
          %v569 = vpop.f32.mrf.mxu0
          %v570 = vadd.f32 0.0, %v569
          %v571 = vpop.f32.mrf.mxu0
          %v572 = vpop.f32.mrf.mxu0
          %v573 = vpop.f32.mrf.mxu0
          %574 = vdwg.mxu0
          %v575 = vsel %vm390, %v432, -inf
          %576 = vmax.xlane.f32.xlu0 %v575
          %v577 = vpop.xlane.xlu0 %576
          %v578 = vsel %vm390, %v478, -inf
          %579 = vmax.xlane.f32.xlu0 %v578
          %v580 = vpop.xlane.xlu0 %579
          %v581 = vsel %vm390, %v524, -inf
          %582 = vmax.xlane.f32.xlu0 %v581
          %v583 = vpop.xlane.xlu0 %582
          %v584 = vsel %vm390, %v570, -inf
          %585 = vmax.xlane.f32.xlu0 %v584
          %v586 = vpop.xlane.xlu0 %585
          %v587 = vmax.f32 %v363, %v577
          %v588 = vmax.f32 %v364, %v580
          %v589 = vmax.f32 %v365, %v583
          %v590 = vmax.f32 %v366, %v586
          %v591 = vsub.f32 %v363, %v587
          %v592 = vsub.f32 %v364, %v588
          %v593 = vsub.f32 %v365, %v589
          %v594 = vsub.f32 %v366, %v590
          %v595 = vmul.f32 %v591, 1.442695
          %v596 = vpow.pop %v595
          %v597 = vmul.f32 %v592, 1.442695
          %v598 = vpow.pop %v597
          %v599 = vmul.f32 %v593, 1.442695
          %v600 = vpow.pop %v599
          %v601 = vmul.f32 %v594, 1.442695
          %v602 = vpow.pop %v601
          %v603 = vsub.f32 %v432, %v587
          %v604 = vsub.f32 %v478, %v588
          %v605 = vsub.f32 %v524, %v589
          %v606 = vsub.f32 %v570, %v590
          %v607 = vmul.f32 %v603, 1.442695
          %v608 = vpow.pop %v607
          %v609 = vmul.f32 %v604, 1.442695
          %v610 = vpow.pop %v609
          %v611 = vmul.f32 %v605, 1.442695
          %v612 = vpow.pop %v611
          %v613 = vmul.f32 %v606, 1.442695
          %v614 = vpow.pop %v613
          %v615 = vmul.f32 %v596, %v367
          %v616 = vmul.f32 %v598, %v368
          %v617 = vmul.f32 %v600, %v369
          %v618 = vmul.f32 %v602, %v370
          %v619 = vsel %vm390, %v608, 0.0
          %620 = vadd.xlane.f32.xlu0 %v619
          %v621 = vpop.xlane.xlu0 %620
          %v622 = vsel %vm390, %v610, 0.0
          %623 = vadd.xlane.f32.xlu0 %v622
          %v624 = vpop.xlane.xlu0 %623
          %v625 = vsel %vm390, %v612, 0.0
          %626 = vadd.xlane.f32.xlu0 %v625
          %v627 = vpop.xlane.xlu0 %626
          %v628 = vsel %vm390, %v614, 0.0
          %629 = vadd.xlane.f32.xlu0 %v628
          %v630 = vpop.xlane.xlu0 %629
          %v631 = vadd.f32 %v615, %v621
          %v632 = vadd.f32 %v616, %v624
          %v633 = vadd.f32 %v617, %v627
          %v634 = vadd.f32 %v618, %v630
          %v635 = vmul.f32 %v596, %v371
          %v636 = vmul.f32 %v598, %v372
          %v637 = vmul.f32 %v600, %v373
          %v638 = vmul.f32 %v602, %v374
          %v639 = vpack.c.bf16 %v608, %v608
          %v640 = vpack.c.bf16 %v610, %v610
          %v641 = vpack.c.bf16 %v612, %v612
          %v642 = vpack.c.bf16 %v614, %v614
          %v644 = vsel %vm390, %v639, 0
          %vm646 = vcmask 1043456
          %v648 = vsel %vm646, %v386, 0
          %650 = vmatprep.subr.bf16.mxu0 0
          %651 = vmatpush1.bf16.msra.mxu0 0
          %652 = vmatprep.subr.bf16.mxu0 0
          %653 = vmatpush1.bf16.msra.mxu0 0
          %654 = vmatprep.subr.bf16.mxu0 0
          %655 = vmatpush1.bf16.msra.mxu0 0
          %656 = vmatprep.subr.bf16.mxu0 0
          %657 = vmatpush1.bf16.msra.mxu0 0
          %658 = vmatprep.subr.bf16.mxu0 0
          %659 = vmatpush1.bf16.msra.mxu0 0
          %660 = vmatprep.subr.bf16.mxu0 0
          %661 = vmatpush1.bf16.msra.mxu0 0
          %662 = vmatprep.subr.bf16.mxu0 0
          %663 = vmatpush1.bf16.msra.mxu0 0
          %664 = vmatprep.subr.bf16.mxu0 0
          %665 = vmatpush1.bf16.msra.mxu0 %v648
          %666 = vmatprep.subr.bf16.mxu0 0
          %667 = vmatpush2.bf16.msra.mxu0 0
          %668 = vmatprep.subr.bf16.mxu0 0
          %669 = vmatpush2.bf16.msra.mxu0 0
          %670 = vmatprep.subr.bf16.mxu0 0
          %671 = vmatpush2.bf16.msra.mxu0 0
          %672 = vmatprep.subr.bf16.mxu0 0
          %673 = vmatpush2.bf16.msra.mxu0 0
          %674 = vmatprep.subr.bf16.mxu0 0
          %675 = vmatpush2.bf16.msra.mxu0 0
          %676 = vmatprep.subr.bf16.mxu0 0
          %677 = vmatpush2.bf16.msra.mxu0 0
          %678 = vmatprep.subr.bf16.mxu0 0
          %679 = vmatpush2.bf16.msra.mxu0 0
          %680 = vmatprep.subr.bf16.mxu0 0
          %681 = vmatpush2.bf16.msra.mxu0 0
          %682 = vmatprep.mubr.bf16.mxu0 0
          %683 = vmatmul.mubr.bf16.gmra.mxu0 %v644
          %v684 = vpop.f32.mrf.mxu0
          %v685 = vadd.f32 0.0, %v684
          %v686 = vpop.f32.mrf.mxu0
          %v687 = vpop.f32.mrf.mxu0
          %v688 = vpop.f32.mrf.mxu0
          %689 = vdwg.mxu0
          %v691 = vsel %vm390, %v640, 0
          %v694 = vsel %vm646, %v387, 0
          %696 = vmatprep.subr.bf16.mxu0 0
          %697 = vmatpush1.bf16.msra.mxu0 0
          %698 = vmatprep.subr.bf16.mxu0 0
          %699 = vmatpush1.bf16.msra.mxu0 0
          %700 = vmatprep.subr.bf16.mxu0 0
          %701 = vmatpush1.bf16.msra.mxu0 0
          %702 = vmatprep.subr.bf16.mxu0 0
          %703 = vmatpush1.bf16.msra.mxu0 0
          %704 = vmatprep.subr.bf16.mxu0 0
          %705 = vmatpush1.bf16.msra.mxu0 0
          %706 = vmatprep.subr.bf16.mxu0 0
          %707 = vmatpush1.bf16.msra.mxu0 0
          %708 = vmatprep.subr.bf16.mxu0 0
          %709 = vmatpush1.bf16.msra.mxu0 0
          %710 = vmatprep.subr.bf16.mxu0 0
          %711 = vmatpush1.bf16.msra.mxu0 %v694
          %712 = vmatprep.subr.bf16.mxu0 0
          %713 = vmatpush2.bf16.msra.mxu0 0
          %714 = vmatprep.subr.bf16.mxu0 0
          %715 = vmatpush2.bf16.msra.mxu0 0
          %716 = vmatprep.subr.bf16.mxu0 0
          %717 = vmatpush2.bf16.msra.mxu0 0
          %718 = vmatprep.subr.bf16.mxu0 0
          %719 = vmatpush2.bf16.msra.mxu0 0
          %720 = vmatprep.subr.bf16.mxu0 0
          %721 = vmatpush2.bf16.msra.mxu0 0
          %722 = vmatprep.subr.bf16.mxu0 0
          %723 = vmatpush2.bf16.msra.mxu0 0
          %724 = vmatprep.subr.bf16.mxu0 0
          %725 = vmatpush2.bf16.msra.mxu0 0
          %726 = vmatprep.subr.bf16.mxu0 0
          %727 = vmatpush2.bf16.msra.mxu0 0
          %728 = vmatprep.mubr.bf16.mxu0 0
          %729 = vmatmul.mubr.bf16.gmra.mxu0 %v691
          %v730 = vpop.f32.mrf.mxu0
          %v731 = vadd.f32 0.0, %v730
          %v732 = vpop.f32.mrf.mxu0
          %v733 = vpop.f32.mrf.mxu0
          %v734 = vpop.f32.mrf.mxu0
          %735 = vdwg.mxu0
          %v737 = vsel %vm390, %v641, 0
          %v740 = vsel %vm646, %v388, 0
          %742 = vmatprep.subr.bf16.mxu0 0
          %743 = vmatpush1.bf16.msra.mxu0 0
          %744 = vmatprep.subr.bf16.mxu0 0
          %745 = vmatpush1.bf16.msra.mxu0 0
          %746 = vmatprep.subr.bf16.mxu0 0
          %747 = vmatpush1.bf16.msra.mxu0 0
          %748 = vmatprep.subr.bf16.mxu0 0
          %749 = vmatpush1.bf16.msra.mxu0 0
          %750 = vmatprep.subr.bf16.mxu0 0
          %751 = vmatpush1.bf16.msra.mxu0 0
          %752 = vmatprep.subr.bf16.mxu0 0
          %753 = vmatpush1.bf16.msra.mxu0 0
          %754 = vmatprep.subr.bf16.mxu0 0
          %755 = vmatpush1.bf16.msra.mxu0 0
          %756 = vmatprep.subr.bf16.mxu0 0
          %757 = vmatpush1.bf16.msra.mxu0 %v740
          %758 = vmatprep.subr.bf16.mxu0 0
          %759 = vmatpush2.bf16.msra.mxu0 0
          %760 = vmatprep.subr.bf16.mxu0 0
          %761 = vmatpush2.bf16.msra.mxu0 0
          %762 = vmatprep.subr.bf16.mxu0 0
          %763 = vmatpush2.bf16.msra.mxu0 0
          %764 = vmatprep.subr.bf16.mxu0 0
          %765 = vmatpush2.bf16.msra.mxu0 0
          %766 = vmatprep.subr.bf16.mxu0 0
          %767 = vmatpush2.bf16.msra.mxu0 0
          %768 = vmatprep.subr.bf16.mxu0 0
          %769 = vmatpush2.bf16.msra.mxu0 0
          %770 = vmatprep.subr.bf16.mxu0 0
          %771 = vmatpush2.bf16.msra.mxu0 0
          %772 = vmatprep.subr.bf16.mxu0 0
          %773 = vmatpush2.bf16.msra.mxu0 0
          %774 = vmatprep.mubr.bf16.mxu0 0
          %775 = vmatmul.mubr.bf16.gmra.mxu0 %v737
          %v776 = vpop.f32.mrf.mxu0
          %v777 = vadd.f32 0.0, %v776
          %v778 = vpop.f32.mrf.mxu0
          %v779 = vpop.f32.mrf.mxu0
          %v780 = vpop.f32.mrf.mxu0
          %781 = vdwg.mxu0
          %v783 = vsel %vm390, %v642, 0
          %v786 = vsel %vm646, %v389, 0
          %788 = vmatprep.subr.bf16.mxu0 0
          %789 = vmatpush1.bf16.msra.mxu0 0
          %790 = vmatprep.subr.bf16.mxu0 0
          %791 = vmatpush1.bf16.msra.mxu0 0
          %792 = vmatprep.subr.bf16.mxu0 0
          %793 = vmatpush1.bf16.msra.mxu0 0
          %794 = vmatprep.subr.bf16.mxu0 0
          %795 = vmatpush1.bf16.msra.mxu0 0
          %796 = vmatprep.subr.bf16.mxu0 0
          %797 = vmatpush1.bf16.msra.mxu0 0
          %798 = vmatprep.subr.bf16.mxu0 0
          %799 = vmatpush1.bf16.msra.mxu0 0
          %800 = vmatprep.subr.bf16.mxu0 0
          %801 = vmatpush1.bf16.msra.mxu0 0
          %802 = vmatprep.subr.bf16.mxu0 0
          %803 = vmatpush1.bf16.msra.mxu0 %v786
          %804 = vmatprep.subr.bf16.mxu0 0
          %805 = vmatpush2.bf16.msra.mxu0 0
          %806 = vmatprep.subr.bf16.mxu0 0
          %807 = vmatpush2.bf16.msra.mxu0 0
          %808 = vmatprep.subr.bf16.mxu0 0
          %809 = vmatpush2.bf16.msra.mxu0 0
          %810 = vmatprep.subr.bf16.mxu0 0
          %811 = vmatpush2.bf16.msra.mxu0 0
          %812 = vmatprep.subr.bf16.mxu0 0
          %813 = vmatpush2.bf16.msra.mxu0 0
          %814 = vmatprep.subr.bf16.mxu0 0
          %815 = vmatpush2.bf16.msra.mxu0 0
          %816 = vmatprep.subr.bf16.mxu0 0
          %817 = vmatpush2.bf16.msra.mxu0 0
          %818 = vmatprep.subr.bf16.mxu0 0
          %819 = vmatpush2.bf16.msra.mxu0 0
          %820 = vmatprep.mubr.bf16.mxu0 0
          %821 = vmatmul.mubr.bf16.gmra.mxu0 %v783
          %v822 = vpop.f32.mrf.mxu0
          %v823 = vadd.f32 0.0, %v822
          %v824 = vpop.f32.mrf.mxu0
          %v825 = vpop.f32.mrf.mxu0
          %v826 = vpop.f32.mrf.mxu0
          %827 = vdwg.mxu0
          %v828 = vadd.f32 %v635, %v685
          %v829 = vadd.f32 %v636, %v731
          %v830 = vadd.f32 %v637, %v777
          %v831 = vadd.f32 %v638, %v823
        $region61: #{tpu_custom_call.1} parent=39 // loop_footer
          %s360 = sadd.s32 %s358, 1
        $region62: #{tpu_custom_call.1} parent=39 // loop_footer_branch
          %357 = sbr.rel target = $region58
        $region63: #{tpu_custom_call.1} parent=39 // loop_exit
          _
        %v832 = vlaneseq
        %v833 = vshrl.u32 %v832, 7
        %v834 = vlaneseq
        %v835 = vand.u32 %v834, 127
        %s836 = smul.u32 %s31, 8
        %vm837 = vcmp.le.s32.totalorder %v835, %v833
        %s838 = sshra.s32 %s836, 3
        %s839 = sand.u32 %s836, 7
        %s840 = smul.addr %s838, 4
        %s841 = scalar_lea.vmem %s302, %s840 [#allocation5]
        %v842 = vld [vmem:[%s841] sm:$0xf]
        %v843 = vld [vmem:[%s841 + $0x4] sm:$0xf]
        %v844 = vld [vmem:[%s841 + $0x8] sm:$0xf]
        %v845 = vld [vmem:[%s841 + $0xc] sm:$0xf]
        %s846 = smul.addr %s838, 4
        %s847 = scalar_lea.vmem %s311, %s846 [#allocation7]
        %v848 = vld [vmem:[%s847] sm:$0xf]
        %v849 = vld [vmem:[%s847 + $0x4] sm:$0xf]
        %v850 = vld [vmem:[%s847 + $0x8] sm:$0xf]
        %v851 = vld [vmem:[%s847 + $0xc] sm:$0xf]
        %vm852 = vcmask 64512
        %v854 = vsel %vm852, %v353, 0
        %v857 = vsel %vm852, %v842, 0
        %859 = vmatprep.subr.bf16.mxu0 0
        %860 = vmatpush1.bf16.xpose.msra.mxu0 0
        %861 = vmatprep.subr.bf16.mxu0 0
        %862 = vmatpush1.bf16.xpose.msra.mxu0 0
        %863 = vmatprep.subr.bf16.mxu0 0
        %864 = vmatpush1.bf16.xpose.msra.mxu0 0
        %865 = vmatprep.subr.bf16.mxu0 0
        %866 = vmatpush1.bf16.xpose.msra.mxu0 0
        %867 = vmatprep.subr.bf16.mxu0 0
        %868 = vmatpush1.bf16.xpose.msra.mxu0 0
        %869 = vmatprep.subr.bf16.mxu0 0
        %870 = vmatpush1.bf16.xpose.msra.mxu0 0
        %871 = vmatprep.subr.bf16.mxu0 0
        %872 = vmatpush1.bf16.xpose.msra.mxu0 0
        %873 = vmatprep.subr.bf16.mxu0 0
        %874 = vmatpush1.bf16.xpose.msra.mxu0 %v857
        %875 = vmatprep.subr.bf16.mxu0 0
        %876 = vmatpush2.bf16.xpose.msra.mxu0 0
        %877 = vmatprep.subr.bf16.mxu0 0
        %878 = vmatpush2.bf16.xpose.msra.mxu0 0
        %879 = vmatprep.subr.bf16.mxu0 0
        %880 = vmatpush2.bf16.xpose.msra.mxu0 0
        %881 = vmatprep.subr.bf16.mxu0 0
        %882 = vmatpush2.bf16.xpose.msra.mxu0 0
        %883 = vmatprep.subr.bf16.mxu0 0
        %884 = vmatpush2.bf16.xpose.msra.mxu0 0
        %885 = vmatprep.subr.bf16.mxu0 0
        %886 = vmatpush2.bf16.xpose.msra.mxu0 0
        %887 = vmatprep.subr.bf16.mxu0 0
        %888 = vmatpush2.bf16.xpose.msra.mxu0 0
        %889 = vmatprep.subr.bf16.mxu0 0
        %890 = vmatpush2.bf16.xpose.msra.mxu0 0
        %891 = vmatprep.mubr.bf16.mxu0 0
        %892 = vmatmul.mubr.bf16.gmra.mxu0 %v854
        %v893 = vpop.f32.mrf.mxu0
        %v894 = vadd.f32 0.0, %v893
        %v895 = vpop.f32.mrf.mxu0
        %v896 = vpop.f32.mrf.mxu0
        %v897 = vpop.f32.mrf.mxu0
        %898 = vdwg.mxu0
        %v900 = vsel %vm852, %v354, 0
        %v903 = vsel %vm852, %v843, 0
        %905 = vmatprep.subr.bf16.mxu0 0
        %906 = vmatpush1.bf16.xpose.msra.mxu0 0
        %907 = vmatprep.subr.bf16.mxu0 0
        %908 = vmatpush1.bf16.xpose.msra.mxu0 0
        %909 = vmatprep.subr.bf16.mxu0 0
        %910 = vmatpush1.bf16.xpose.msra.mxu0 0
        %911 = vmatprep.subr.bf16.mxu0 0
        %912 = vmatpush1.bf16.xpose.msra.mxu0 0
        %913 = vmatprep.subr.bf16.mxu0 0
        %914 = vmatpush1.bf16.xpose.msra.mxu0 0
        %915 = vmatprep.subr.bf16.mxu0 0
        %916 = vmatpush1.bf16.xpose.msra.mxu0 0
        %917 = vmatprep.subr.bf16.mxu0 0
        %918 = vmatpush1.bf16.xpose.msra.mxu0 0
        %919 = vmatprep.subr.bf16.mxu0 0
        %920 = vmatpush1.bf16.xpose.msra.mxu0 %v903
        %921 = vmatprep.subr.bf16.mxu0 0
        %922 = vmatpush2.bf16.xpose.msra.mxu0 0
        %923 = vmatprep.subr.bf16.mxu0 0
        %924 = vmatpush2.bf16.xpose.msra.mxu0 0
        %925 = vmatprep.subr.bf16.mxu0 0
        %926 = vmatpush2.bf16.xpose.msra.mxu0 0
        %927 = vmatprep.subr.bf16.mxu0 0
        %928 = vmatpush2.bf16.xpose.msra.mxu0 0
        %929 = vmatprep.subr.bf16.mxu0 0
        %930 = vmatpush2.bf16.xpose.msra.mxu0 0
        %931 = vmatprep.subr.bf16.mxu0 0
        %932 = vmatpush2.bf16.xpose.msra.mxu0 0
        %933 = vmatprep.subr.bf16.mxu0 0
        %934 = vmatpush2.bf16.xpose.msra.mxu0 0
        %935 = vmatprep.subr.bf16.mxu0 0
        %936 = vmatpush2.bf16.xpose.msra.mxu0 0
        %937 = vmatprep.mubr.bf16.mxu0 0
        %938 = vmatmul.mubr.bf16.gmra.mxu0 %v900
        %v939 = vpop.f32.mrf.mxu0
        %v940 = vadd.f32 0.0, %v939
        %v941 = vpop.f32.mrf.mxu0
        %v942 = vpop.f32.mrf.mxu0
        %v943 = vpop.f32.mrf.mxu0
        %944 = vdwg.mxu0
        %v946 = vsel %vm852, %v355, 0
        %v949 = vsel %vm852, %v844, 0
        %951 = vmatprep.subr.bf16.mxu0 0
        %952 = vmatpush1.bf16.xpose.msra.mxu0 0
        %953 = vmatprep.subr.bf16.mxu0 0
        %954 = vmatpush1.bf16.xpose.msra.mxu0 0
        %955 = vmatprep.subr.bf16.mxu0 0
        %956 = vmatpush1.bf16.xpose.msra.mxu0 0
        %957 = vmatprep.subr.bf16.mxu0 0
        %958 = vmatpush1.bf16.xpose.msra.mxu0 0
        %959 = vmatprep.subr.bf16.mxu0 0
        %960 = vmatpush1.bf16.xpose.msra.mxu0 0
        %961 = vmatprep.subr.bf16.mxu0 0
        %962 = vmatpush1.bf16.xpose.msra.mxu0 0
        %963 = vmatprep.subr.bf16.mxu0 0
        %964 = vmatpush1.bf16.xpose.msra.mxu0 0
        %965 = vmatprep.subr.bf16.mxu0 0
        %966 = vmatpush1.bf16.xpose.msra.mxu0 %v949
        %967 = vmatprep.subr.bf16.mxu0 0
        %968 = vmatpush2.bf16.xpose.msra.mxu0 0
        %969 = vmatprep.subr.bf16.mxu0 0
        %970 = vmatpush2.bf16.xpose.msra.mxu0 0
        %971 = vmatprep.subr.bf16.mxu0 0
        %972 = vmatpush2.bf16.xpose.msra.mxu0 0
        %973 = vmatprep.subr.bf16.mxu0 0
        %974 = vmatpush2.bf16.xpose.msra.mxu0 0
        %975 = vmatprep.subr.bf16.mxu0 0
        %976 = vmatpush2.bf16.xpose.msra.mxu0 0
        %977 = vmatprep.subr.bf16.mxu0 0
        %978 = vmatpush2.bf16.xpose.msra.mxu0 0
        %979 = vmatprep.subr.bf16.mxu0 0
        %980 = vmatpush2.bf16.xpose.msra.mxu0 0
        %981 = vmatprep.subr.bf16.mxu0 0
        %982 = vmatpush2.bf16.xpose.msra.mxu0 0
        %983 = vmatprep.mubr.bf16.mxu0 0
        %984 = vmatmul.mubr.bf16.gmra.mxu0 %v946
        %v985 = vpop.f32.mrf.mxu0
        %v986 = vadd.f32 0.0, %v985
        %v987 = vpop.f32.mrf.mxu0
        %v988 = vpop.f32.mrf.mxu0
        %v989 = vpop.f32.mrf.mxu0
        %990 = vdwg.mxu0
        %v992 = vsel %vm852, %v356, 0
        %v995 = vsel %vm852, %v845, 0
        %997 = vmatprep.subr.bf16.mxu0 0
        %998 = vmatpush1.bf16.xpose.msra.mxu0 0
        %999 = vmatprep.subr.bf16.mxu0 0
        %1000 = vmatpush1.bf16.xpose.msra.mxu0 0
        %1001 = vmatprep.subr.bf16.mxu0 0
        %1002 = vmatpush1.bf16.xpose.msra.mxu0 0
        %1003 = vmatprep.subr.bf16.mxu0 0
        %1004 = vmatpush1.bf16.xpose.msra.mxu0 0
        %1005 = vmatprep.subr.bf16.mxu0 0
        %1006 = vmatpush1.bf16.xpose.msra.mxu0 0
        %1007 = vmatprep.subr.bf16.mxu0 0
        %1008 = vmatpush1.bf16.xpose.msra.mxu0 0
        %1009 = vmatprep.subr.bf16.mxu0 0
        %1010 = vmatpush1.bf16.xpose.msra.mxu0 0
        %1011 = vmatprep.subr.bf16.mxu0 0
        %1012 = vmatpush1.bf16.xpose.msra.mxu0 %v995
        %1013 = vmatprep.subr.bf16.mxu0 0
        %1014 = vmatpush2.bf16.xpose.msra.mxu0 0
        %1015 = vmatprep.subr.bf16.mxu0 0
        %1016 = vmatpush2.bf16.xpose.msra.mxu0 0
        %1017 = vmatprep.subr.bf16.mxu0 0
        %1018 = vmatpush2.bf16.xpose.msra.mxu0 0
        %1019 = vmatprep.subr.bf16.mxu0 0
        %1020 = vmatpush2.bf16.xpose.msra.mxu0 0
        %1021 = vmatprep.subr.bf16.mxu0 0
        %1022 = vmatpush2.bf16.xpose.msra.mxu0 0
        %1023 = vmatprep.subr.bf16.mxu0 0
        %1024 = vmatpush2.bf16.xpose.msra.mxu0 0
        %1025 = vmatprep.subr.bf16.mxu0 0
        %1026 = vmatpush2.bf16.xpose.msra.mxu0 0
        %1027 = vmatprep.subr.bf16.mxu0 0
        %1028 = vmatpush2.bf16.xpose.msra.mxu0 0
        %1029 = vmatprep.mubr.bf16.mxu0 0
        %1030 = vmatmul.mubr.bf16.gmra.mxu0 %v992
        %v1031 = vpop.f32.mrf.mxu0
        %v1032 = vadd.f32 0.0, %v1031
        %v1033 = vpop.f32.mrf.mxu0
        %v1034 = vpop.f32.mrf.mxu0
        %v1035 = vpop.f32.mrf.mxu0
        %1036 = vdwg.mxu0
        %v1037 = vsel %vm837, 1, 0
        %vm1038 = vcmp.eq.s32.totalorder %v1037, 1
        %v1039 = vsel %vm1038, %v894, -inf
        %v1040 = vsel %vm1038, %v940, -inf
        %v1041 = vsel %vm1038, %v986, -inf
        %v1042 = vsel %vm1038, %v1032, -inf
        %v1043 = vsel %vm852, %v1039, -inf
        %1044 = vmax.xlane.f32.xlu0 %v1043
        %v1045 = vpop.xlane.xlu0 %1044
        %v1046 = vsel %vm852, %v1040, -inf
        %1047 = vmax.xlane.f32.xlu0 %v1046
        %v1048 = vpop.xlane.xlu0 %1047
        %v1049 = vsel %vm852, %v1041, -inf
        %1050 = vmax.xlane.f32.xlu0 %v1049
        %v1051 = vpop.xlane.xlu0 %1050
        %v1052 = vsel %vm852, %v1042, -inf
        %1053 = vmax.xlane.f32.xlu0 %v1052
        %v1054 = vpop.xlane.xlu0 %1053
        %v1055 = vmax.f32 %v363, %v1045
        %v1056 = vmax.f32 %v364, %v1048
        %v1057 = vmax.f32 %v365, %v1051
        %v1058 = vmax.f32 %v366, %v1054
        %v1059 = vsub.f32 %v363, %v1055
        %v1060 = vsub.f32 %v364, %v1056
        %v1061 = vsub.f32 %v365, %v1057
        %v1062 = vsub.f32 %v366, %v1058
        %v1063 = vmul.f32 %v1059, 1.442695
        %v1064 = vpow.pop %v1063
        %v1065 = vmul.f32 %v1060, 1.442695
        %v1066 = vpow.pop %v1065
        %v1067 = vmul.f32 %v1061, 1.442695
        %v1068 = vpow.pop %v1067
        %v1069 = vmul.f32 %v1062, 1.442695
        %v1070 = vpow.pop %v1069
        %v1071 = vsub.f32 %v1039, %v1055
        %v1072 = vsub.f32 %v1040, %v1056
        %v1073 = vsub.f32 %v1041, %v1057
        %v1074 = vsub.f32 %v1042, %v1058
        %v1075 = vmul.f32 %v1071, 1.442695
        %v1076 = vpow.pop %v1075
        %v1077 = vmul.f32 %v1072, 1.442695
        %v1078 = vpow.pop %v1077
        %v1079 = vmul.f32 %v1073, 1.442695
        %v1080 = vpow.pop %v1079
        %v1081 = vmul.f32 %v1074, 1.442695
        %v1082 = vpow.pop %v1081
        %v1083 = vmul.f32 %v1064, %v367
        %v1084 = vmul.f32 %v1066, %v368
        %v1085 = vmul.f32 %v1068, %v369
        %v1086 = vmul.f32 %v1070, %v370
        %v1087 = vsel %vm852, %v1076, 0.0
        %1088 = vadd.xlane.f32.xlu0 %v1087
        %v1089 = vpop.xlane.xlu0 %1088
        %v1090 = vsel %vm852, %v1078, 0.0
        %1091 = vadd.xlane.f32.xlu0 %v1090
        %v1092 = vpop.xlane.xlu0 %1091
        %v1093 = vsel %vm852, %v1080, 0.0
        %1094 = vadd.xlane.f32.xlu0 %v1093
        %v1095 = vpop.xlane.xlu0 %1094
        %v1096 = vsel %vm852, %v1082, 0.0
        %1097 = vadd.xlane.f32.xlu0 %v1096
        %v1098 = vpop.xlane.xlu0 %1097
        %v1099 = vadd.f32 %v1083, %v1089
        %v1100 = vadd.f32 %v1084, %v1092
        %v1101 = vadd.f32 %v1085, %v1095
        %v1102 = vadd.f32 %v1086, %v1098
        %v1103 = vmul.f32 %v1064, %v371
        %v1104 = vmul.f32 %v1066, %v372
        %v1105 = vmul.f32 %v1068, %v373
        %v1106 = vmul.f32 %v1070, %v374
        %v1107 = vpack.c.bf16 %v1076, %v1076
        %v1108 = vpack.c.bf16 %v1078, %v1078
        %v1109 = vpack.c.bf16 %v1080, %v1080
        %v1110 = vpack.c.bf16 %v1082, %v1082
        %v1112 = vsel %vm852, %v1107, 0
        %vm1114 = vcmask 1043456
        %v1116 = vsel %vm1114, %v848, 0
        %1118 = vmatprep.subr.bf16.mxu0 0
        %1119 = vmatpush1.bf16.msra.mxu0 0
        %1120 = vmatprep.subr.bf16.mxu0 0
        %1121 = vmatpush1.bf16.msra.mxu0 0
        %1122 = vmatprep.subr.bf16.mxu0 0
        %1123 = vmatpush1.bf16.msra.mxu0 0
        %1124 = vmatprep.subr.bf16.mxu0 0
        %1125 = vmatpush1.bf16.msra.mxu0 0
        %1126 = vmatprep.subr.bf16.mxu0 0
        %1127 = vmatpush1.bf16.msra.mxu0 0
        %1128 = vmatprep.subr.bf16.mxu0 0
        %1129 = vmatpush1.bf16.msra.mxu0 0
        %1130 = vmatprep.subr.bf16.mxu0 0
        %1131 = vmatpush1.bf16.msra.mxu0 0
        %1132 = vmatprep.subr.bf16.mxu0 0
        %1133 = vmatpush1.bf16.msra.mxu0 %v1116
        %1134 = vmatprep.subr.bf16.mxu0 0
        %1135 = vmatpush2.bf16.msra.mxu0 0
        %1136 = vmatprep.subr.bf16.mxu0 0
        %1137 = vmatpush2.bf16.msra.mxu0 0
        %1138 = vmatprep.subr.bf16.mxu0 0
        %1139 = vmatpush2.bf16.msra.mxu0 0
        %1140 = vmatprep.subr.bf16.mxu0 0
        %1141 = vmatpush2.bf16.msra.mxu0 0
        %1142 = vmatprep.subr.bf16.mxu0 0
        %1143 = vmatpush2.bf16.msra.mxu0 0
        %1144 = vmatprep.subr.bf16.mxu0 0
        %1145 = vmatpush2.bf16.msra.mxu0 0
        %1146 = vmatprep.subr.bf16.mxu0 0
        %1147 = vmatpush2.bf16.msra.mxu0 0
        %1148 = vmatprep.subr.bf16.mxu0 0
        %1149 = vmatpush2.bf16.msra.mxu0 0
        %1150 = vmatprep.mubr.bf16.mxu0 0
        %1151 = vmatmul.mubr.bf16.gmra.mxu0 %v1112
        %v1152 = vpop.f32.mrf.mxu0
        %v1153 = vadd.f32 0.0, %v1152
        %v1154 = vpop.f32.mrf.mxu0
        %v1155 = vpop.f32.mrf.mxu0
        %v1156 = vpop.f32.mrf.mxu0
        %1157 = vdwg.mxu0
        %v1159 = vsel %vm852, %v1108, 0
        %v1162 = vsel %vm1114, %v849, 0
        %1164 = vmatprep.subr.bf16.mxu0 0
        %1165 = vmatpush1.bf16.msra.mxu0 0
        %1166 = vmatprep.subr.bf16.mxu0 0
        %1167 = vmatpush1.bf16.msra.mxu0 0
        %1168 = vmatprep.subr.bf16.mxu0 0
        %1169 = vmatpush1.bf16.msra.mxu0 0
        %1170 = vmatprep.subr.bf16.mxu0 0
        %1171 = vmatpush1.bf16.msra.mxu0 0
        %1172 = vmatprep.subr.bf16.mxu0 0
        %1173 = vmatpush1.bf16.msra.mxu0 0
        %1174 = vmatprep.subr.bf16.mxu0 0
        %1175 = vmatpush1.bf16.msra.mxu0 0
        %1176 = vmatprep.subr.bf16.mxu0 0
        %1177 = vmatpush1.bf16.msra.mxu0 0
        %1178 = vmatprep.subr.bf16.mxu0 0
        %1179 = vmatpush1.bf16.msra.mxu0 %v1162
        %1180 = vmatprep.subr.bf16.mxu0 0
        %1181 = vmatpush2.bf16.msra.mxu0 0
        %1182 = vmatprep.subr.bf16.mxu0 0
        %1183 = vmatpush2.bf16.msra.mxu0 0
        %1184 = vmatprep.subr.bf16.mxu0 0
        %1185 = vmatpush2.bf16.msra.mxu0 0
        %1186 = vmatprep.subr.bf16.mxu0 0
        %1187 = vmatpush2.bf16.msra.mxu0 0
        %1188 = vmatprep.subr.bf16.mxu0 0
        %1189 = vmatpush2.bf16.msra.mxu0 0
        %1190 = vmatprep.subr.bf16.mxu0 0
        %1191 = vmatpush2.bf16.msra.mxu0 0
        %1192 = vmatprep.subr.bf16.mxu0 0
        %1193 = vmatpush2.bf16.msra.mxu0 0
        %1194 = vmatprep.subr.bf16.mxu0 0
        %1195 = vmatpush2.bf16.msra.mxu0 0
        %1196 = vmatprep.mubr.bf16.mxu0 0
        %1197 = vmatmul.mubr.bf16.gmra.mxu0 %v1159
        %v1198 = vpop.f32.mrf.mxu0
        %v1199 = vadd.f32 0.0, %v1198
        %v1200 = vpop.f32.mrf.mxu0
        %v1201 = vpop.f32.mrf.mxu0
        %v1202 = vpop.f32.mrf.mxu0
        %1203 = vdwg.mxu0
        %v1205 = vsel %vm852, %v1109, 0
        %v1208 = vsel %vm1114, %v850, 0
        %1210 = vmatprep.subr.bf16.mxu0 0
        %1211 = vmatpush1.bf16.msra.mxu0 0
        %1212 = vmatprep.subr.bf16.mxu0 0
        %1213 = vmatpush1.bf16.msra.mxu0 0
        %1214 = vmatprep.subr.bf16.mxu0 0
        %1215 = vmatpush1.bf16.msra.mxu0 0
        %1216 = vmatprep.subr.bf16.mxu0 0
        %1217 = vmatpush1.bf16.msra.mxu0 0
        %1218 = vmatprep.subr.bf16.mxu0 0
        %1219 = vmatpush1.bf16.msra.mxu0 0
        %1220 = vmatprep.subr.bf16.mxu0 0
        %1221 = vmatpush1.bf16.msra.mxu0 0
        %1222 = vmatprep.subr.bf16.mxu0 0
        %1223 = vmatpush1.bf16.msra.mxu0 0
        %1224 = vmatprep.subr.bf16.mxu0 0
        %1225 = vmatpush1.bf16.msra.mxu0 %v1208
        %1226 = vmatprep.subr.bf16.mxu0 0
        %1227 = vmatpush2.bf16.msra.mxu0 0
        %1228 = vmatprep.subr.bf16.mxu0 0
        %1229 = vmatpush2.bf16.msra.mxu0 0
        %1230 = vmatprep.subr.bf16.mxu0 0
        %1231 = vmatpush2.bf16.msra.mxu0 0
        %1232 = vmatprep.subr.bf16.mxu0 0
        %1233 = vmatpush2.bf16.msra.mxu0 0
        %1234 = vmatprep.subr.bf16.mxu0 0
        %1235 = vmatpush2.bf16.msra.mxu0 0
        %1236 = vmatprep.subr.bf16.mxu0 0
        %1237 = vmatpush2.bf16.msra.mxu0 0
        %1238 = vmatprep.subr.bf16.mxu0 0
        %1239 = vmatpush2.bf16.msra.mxu0 0
        %1240 = vmatprep.subr.bf16.mxu0 0
        %1241 = vmatpush2.bf16.msra.mxu0 0
        %1242 = vmatprep.mubr.bf16.mxu0 0
        %1243 = vmatmul.mubr.bf16.gmra.mxu0 %v1205
        %v1244 = vpop.f32.mrf.mxu0
        %v1245 = vadd.f32 0.0, %v1244
        %v1246 = vpop.f32.mrf.mxu0
        %v1247 = vpop.f32.mrf.mxu0
        %v1248 = vpop.f32.mrf.mxu0
        %1249 = vdwg.mxu0
        %v1251 = vsel %vm852, %v1110, 0
        %v1254 = vsel %vm1114, %v851, 0
        %1256 = vmatprep.subr.bf16.mxu0 0
        %1257 = vmatpush1.bf16.msra.mxu0 0
        %1258 = vmatprep.subr.bf16.mxu0 0
        %1259 = vmatpush1.bf16.msra.mxu0 0
        %1260 = vmatprep.subr.bf16.mxu0 0
        %1261 = vmatpush1.bf16.msra.mxu0 0
        %1262 = vmatprep.subr.bf16.mxu0 0
        %1263 = vmatpush1.bf16.msra.mxu0 0
        %1264 = vmatprep.subr.bf16.mxu0 0
        %1265 = vmatpush1.bf16.msra.mxu0 0
        %1266 = vmatprep.subr.bf16.mxu0 0
        %1267 = vmatpush1.bf16.msra.mxu0 0
        %1268 = vmatprep.subr.bf16.mxu0 0
        %1269 = vmatpush1.bf16.msra.mxu0 0
        %1270 = vmatprep.subr.bf16.mxu0 0
        %1271 = vmatpush1.bf16.msra.mxu0 %v1254
        %1272 = vmatprep.subr.bf16.mxu0 0
        %1273 = vmatpush2.bf16.msra.mxu0 0
        %1274 = vmatprep.subr.bf16.mxu0 0
        %1275 = vmatpush2.bf16.msra.mxu0 0
        %1276 = vmatprep.subr.bf16.mxu0 0
        %1277 = vmatpush2.bf16.msra.mxu0 0
        %1278 = vmatprep.subr.bf16.mxu0 0
        %1279 = vmatpush2.bf16.msra.mxu0 0
        %1280 = vmatprep.subr.bf16.mxu0 0
        %1281 = vmatpush2.bf16.msra.mxu0 0
        %1282 = vmatprep.subr.bf16.mxu0 0
        %1283 = vmatpush2.bf16.msra.mxu0 0
        %1284 = vmatprep.subr.bf16.mxu0 0
        %1285 = vmatpush2.bf16.msra.mxu0 0
        %1286 = vmatprep.subr.bf16.mxu0 0
        %1287 = vmatpush2.bf16.msra.mxu0 0
        %1288 = vmatprep.mubr.bf16.mxu0 0
        %1289 = vmatmul.mubr.bf16.gmra.mxu0 %v1251
        %v1290 = vpop.f32.mrf.mxu0
        %v1291 = vadd.f32 0.0, %v1290
        %v1292 = vpop.f32.mrf.mxu0
        %v1293 = vpop.f32.mrf.mxu0
        %v1294 = vpop.f32.mrf.mxu0
        %1295 = vdwg.mxu0
        %v1296 = vadd.f32 %v1103, %v1153
        %v1297 = vadd.f32 %v1104, %v1199
        %v1298 = vadd.f32 %v1105, %v1245
        %v1299 = vadd.f32 %v1106, %v1291
        %v1300 = vrcp.pop %v1099
        %v1301 = vrcp.pop %v1100
        %v1302 = vrcp.pop %v1101
        %v1303 = vrcp.pop %v1102
        %v1304 = vmul.f32 %v1296, %v1300
        %v1305 = vmul.f32 %v1297, %v1301
        %v1306 = vmul.f32 %v1298, %v1302
        %v1307 = vmul.f32 %v1299, %v1303
        %v1308 = vpack.c.bf16 %v1304, %v1304
        %v1309 = vpack.c.bf16 %v1305, %v1305
        %v1310 = vpack.c.bf16 %v1306, %v1306
        %v1311 = vpack.c.bf16 %v1307, %v1307
        %1313 = vrot.lane.b32.xlu0 %v1309, 8
        %v1314 = vpop.permute.xlu0 %1313
        %1316 = vrot.lane.b32.xlu0 %v1310, 16
        %v1317 = vpop.permute.xlu0 %1316
        %1319 = vrot.lane.b32.xlu0 %v1311, 24
        %v1320 = vpop.permute.xlu0 %1319
        %v1323 = vsel %vm852, %v1308, %v1314
        %vm1324 = vcmask 130048
        %v1326 = vsel %vm1324, %v1323, %v1317
        %vm1327 = vcmask 195584
        %v1329 = vsel %vm1327, %v1326, %v1320
        %v1330 = vld [vmem:[#allocation8] sm:$0xf]
        %v1331 = vld [vmem:[#allocation8 + $0x4] sm:$0xf]
        %v1332 = vld [vmem:[#allocation8 + $0x8] sm:$0xf]
        %v1333 = vld [vmem:[#allocation8 + $0xc] sm:$0xf]
        %v1334 = vld [vmem:[%s4] sm:$0x1]
        %v1336 = vlaneseq
        %v1337 = vshrl.u32 %v1336, 7
        %v1338 = vsub.s32 0, %v1337
        %v1339 = vrot.slane %v1334, %v1338
        %v1345 = vunpack.c.l.b16 %v1330
        %v1346 = vunpack.c.l.b16 %v1331
        %v1347 = vunpack.c.l.b16 %v1332
        %v1348 = vunpack.c.l.b16 %v1333
        %v1349 = vpack.c.b16 %v1346, %v1345
        %v1350 = vpack.c.b16 %v1348, %v1347
        %vm1353 = vcmask 261120
        %v1354 = vsel %vm1353, %v1329, 0
        %1356 = vmatprep.subr.bf16.mxu0 0
        %1357 = vmatpush1.bf16.msra.mxu0 0
        %1358 = vmatprep.subr.bf16.mxu0 0
        %1359 = vmatpush1.bf16.msra.mxu0 0
        %1360 = vmatprep.subr.bf16.mxu0 0
        %1361 = vmatpush1.bf16.msra.mxu0 0
        %1362 = vmatprep.subr.bf16.mxu0 0
        %1363 = vmatpush1.bf16.msra.mxu0 0
        %1364 = vmatprep.subr.bf16.mxu0 0
        %1365 = vmatpush1.bf16.msra.mxu0 0
        %1366 = vmatprep.subr.bf16.mxu0 0
        %1367 = vmatpush1.bf16.msra.mxu0 0
        %1368 = vmatprep.subr.bf16.mxu0 0
        %1369 = vmatpush1.bf16.msra.mxu0 %v1350
        %1370 = vmatprep.subr.bf16.mxu0 0
        %1371 = vmatpush1.bf16.msra.mxu0 %v1349
        %1372 = vmatprep.subr.bf16.mxu0 0
        %1373 = vmatpush2.bf16.msra.mxu0 0
        %1374 = vmatprep.subr.bf16.mxu0 0
        %1375 = vmatpush2.bf16.msra.mxu0 0
        %1376 = vmatprep.subr.bf16.mxu0 0
        %1377 = vmatpush2.bf16.msra.mxu0 0
        %1378 = vmatprep.subr.bf16.mxu0 0
        %1379 = vmatpush2.bf16.msra.mxu0 0
        %1380 = vmatprep.subr.bf16.mxu0 0
        %1381 = vmatpush2.bf16.msra.mxu0 0
        %1382 = vmatprep.subr.bf16.mxu0 0
        %1383 = vmatpush2.bf16.msra.mxu0 0
        %1384 = vmatprep.subr.bf16.mxu0 0
        %1385 = vmatpush2.bf16.msra.mxu0 0
        %1386 = vmatprep.subr.bf16.mxu0 0
        %1387 = vmatpush2.bf16.msra.mxu0 0
        %1388 = vmatprep.mubr.bf16.mxu0 0
        %1389 = vmatmul.mubr.bf16.gmra.mxu0 %v1354
        %v1390 = vpop.f32.mrf.mxu0
        %v1391 = vadd.f32 %v1339, %v1390
        %v1392 = vpop.f32.mrf.mxu0
        %v1393 = vpop.f32.mrf.mxu0
        %v1394 = vpop.f32.mrf.mxu0
        %1395 = vdwg.mxu0
        %1396 = vst.msk [vmem:[%s351] sm:$0xff] %vm1353, %v1391
        %s1397 = sand.u32 %s170, 1
        %s1398 = scalar_lea.sflag [#allocation4], %s1397
        %s1399 = sand.u32 %s170, 1
        %s1400 = smul.addr %s1399, 8
        %s1401 = scalar_lea.vmem [#allocation10], %s1400
        // Predicated region
        $region64: #{tpu_custom_call.1} parent=39 // pred_check
          %p1402 = pneg %p180
        $region65: #{tpu_custom_call.1} parent=39 // pred_check_branch
          %1404 = sbr.rel (%p1402) target = $region67
        $region66: #{tpu_custom_call.1} parent=39 // pred_region
          %s1406 = ssub.s32 128, 128
          %1407 = vsyncadd %s1398, %s1406
          %s1408 = sadd.s32 %s31, %s30
          %s1409 = smul.addr %s1408, 128
          %s1410 = scalar_lea.hbm %s5, %s1409
          %s1412 = sshll.u32 %s1401, 4
          %s1413 = int_to_ptr.vmem [resolvable:$true] %s1412
          %1415 = dma.vmem_to_hbm [thread:$0]  %s1413, 128, %s1410, %s1398
        $region67: #{tpu_custom_call.1} parent=39 // pred_fallthru
          _
      $region40: #{tpu_custom_call.1} parent=5 // pred_fallthru
        _
      %p1416 = scmp.le.s32.totalorder 2, %s21
      // Predicated region
      $region68: #{tpu_custom_call.1} parent=5 // pred_check
        %p1417 = pneg %p1416
      $region69: #{tpu_custom_call.1} parent=5 // pred_check_branch
        %1419 = sbr.rel (%p1417) target = $region71
      $region70: #{tpu_custom_call.1} parent=5 // pred_region
        %s1420 = ssub.s32 %s21, 2
        // Predicated region
        $region72: #{tpu_custom_call.1} parent=70 // pred_check
          %p1421 = pneg %p186
        $region73: #{tpu_custom_call.1} parent=70 // pred_check_branch
          %1423 = sbr.rel (%p1421) target = $region75
        $region74: #{tpu_custom_call.1} parent=70 // pred_region
          %s1424 = sand.u32 %s171, 1
          %s1425 = scalar_lea.sflag [#allocation4], %s1424
          %s1426 = sand.u32 %s171, 1
          %s1427 = smul.addr %s1426, 8
          %s1428 = scalar_lea.vmem [#allocation10], %s1427
          %1429 = dma.done %s1425, 128
        $region75: #{tpu_custom_call.1} parent=70 // pred_fallthru
          _
      $region71: #{tpu_custom_call.1} parent=5 // pred_fallthru
        _
    $region6: #{tpu_custom_call.1} parent=1 // loop_footer
      %s25 = sadd.s32 1, %s21
    $region7: #{tpu_custom_call.1} parent=1 // loop_footer_branch
      %20 = sbr.rel target = $region3
    $region8: #{tpu_custom_call.1} parent=1 // loop_exit
      _
    %1430 = vsyncpa [#allocation3], 1
    %s1431 = scalar_lea.sflag [#allocation3], 1
    %1432 = vsyncpa %s1431, 1
    %1433 = vsyncpa [#allocation6], 1
    %s1434 = scalar_lea.sflag [#allocation6], 1
    %1435 = vsyncpa %s1434, 1
    %1436 = vsyncpa [#allocation9], 1
    %1437 = vsyncpa [#allocation4], 1
    %s1438 = scalar_lea.sflag [#allocation4], 1
    %1439 = vsyncpa %s1438, 1

</llo_original>
